<compile_context>
chip_gen: v7x
topology: tpu7x:2x2x1
jax: 0.10.0
libtpu: 0.0.40
codegen_flags: <defaults>
</compile_context>

<pallas_src>
import functools

import jax
import jax.numpy as jnp
from jax import lax
from jax.experimental import pallas as pl
from jax.experimental.pallas import tpu as pltpu

NSTEPS = 16          # fixed number of leapfrog steps over [t0, t1]
T0, T1 = 0.0, 1.0


def _round_up(x, m):
    return ((x + m - 1) // m) * m


def _device_kind():
    try:
        return jax.devices()[0].device_kind.lower()
    except Exception:
        return ""


def _pick_batch_tile(B):
    """Multiple-of-16 batch tile, capped per generation, >=2 tiles on v7x."""
    kind = _device_kind()
    b16 = _round_up(max(B, 16), 16)
    # M-dim cap: fill one MXU tile (128 on v5e's 4x128^2, 256 on 2x256^2 parts).
    cap = 128 if any(v in kind for v in ("v2", "v3", "v4", "v5")) else 256
    tb = min(b16, cap)
    # v7x has 2 TensorCores per chip: prefer >=2 batch tiles when B permits.
    if "v7" in kind and b16 >= 32 and (b16 // tb) < 2:
        tb = _round_up((b16 + 1) // 2, 16)
    return tb


def _use_bf16_activations():
    """bf16 EUP/VPU exists on v6e/v7x; v5e and older stay f32."""
    kind = _device_kind()
    if not kind:
        return False
    return not any(v in kind for v in ("v2", "v3", "v4", "v5"))


def _ode_leapfrog_kernel(x_ref, w1_ref, b1_ref, w2_ref, b2_ref, o_ref, *,
                         bf16_act):
    """Fixed-step asynchronous-leapfrog ('sym12') integration of an MLP field."""
    h = jnp.float32((T1 - T0) / NSTEPS)
    tb = x_ref.shape[0]

    # Weights stay resident in VMEM (constant index_map); bf16 MXU operands,
    # f32 accumulation via preferred_element_type.
    w1 = w1_ref[...]
    w2 = w2_ref[...]
    # Biases stay as single (1, H)/(1, D) rows; the '+' below sublane-broadcasts
    # per use instead of pinning full (TB, H)/(TB, D) f32 tiles across the loop.
    b1 = b1_ref[...]
    b2 = b2_ref[...]

    def vector_field(z):
        # f(t, z) = tanh(z @ W1 + b1) @ W2 + b2   (autonomous field)
        acc = jnp.dot(z.astype(jnp.bfloat16), w1,
                      preferred_element_type=jnp.float32) + b1
        if bf16_act:
            hdn = jnp.tanh(acc.astype(jnp.bfloat16))
        else:
            hdn = jnp.tanh(acc).astype(jnp.bfloat16)
        return jnp.dot(hdn, w2, preferred_element_type=jnp.float32) + b2

    z0 = x_ref[...].astype(jnp.float32)
    v0 = vector_field(z0)

    def step(_, carry):
        z, v = carry
        z_half = z + (0.5 * h) * v
        f_half = vector_field(z_half)
        v_new = 2.0 * f_half - v
        z_new = z_half + (0.5 * h) * v_new
        return (z_new, v_new)

    # Small tiles: fully unroll (LLO scheduler visibility).  Large tiles: the
    # carry is strictly serial, so cap unroll to avoid spilling f32 tiles.
    unroll = True if tb <= 32 else 2
    z_final, _ = lax.fori_loop(0, NSTEPS, step, (z0, v0), unroll=unroll)
    o_ref[...] = z_final.astype(o_ref.dtype)


def ode_block_forward(x, w1, b1, w2, b2, *, batch_tile=None):
    """JAX wrapper reproducing ODEBlock.forward."""
    # --- input-shape handling (glue, matches the PyTorch branches) ---
    if x.ndim == 2:
        z = x
    elif x.shape[1] > 1:
        z = x[:, -1, :]                      # x[:, -1, :].squeeze(1) in torch
    else:
        z = jnp.squeeze(x, axis=1)

    B, D = z.shape
    H = w1.shape[1]

    # Lane-dense padded feature dims (multiples of 128).  Zero padding of D/H
    # columns is exact for this field: tanh(0) = 0 keeps padded columns zero.
    # Padded batch rows DO integrate a nonzero (wasted) trajectory since
    # f(0) != 0; they are sliced off below, so results are still correct.
    D_pad = _round_up(D, 128)
    H_pad = _round_up(H, 128)
    TB = batch_tile if batch_tile is not None else _pick_batch_tile(B)
    TB = _round_up(max(TB, 16), 16)
    B_pad = _round_up(max(B, TB), TB)

    z_p = jnp.zeros((B_pad, D_pad), jnp.float32).at[:B, :D].set(
        z.astype(jnp.float32))
    w1_p = jnp.zeros((D_pad, H_pad), jnp.bfloat16).at[:D, :H].set(
        w1.astype(jnp.bfloat16))
    b1_p = jnp.zeros((1, H_pad), jnp.float32).at[:, :H].set(
        b1.reshape(1, -1).astype(jnp.float32))
    w2_p = jnp.zeros((H_pad, D_pad), jnp.bfloat16).at[:H, :D].set(
        w2.astype(jnp.bfloat16))
    b2_p = jnp.zeros((1, D_pad), jnp.float32).at[:, :D].set(
        b2.reshape(1, -1).astype(jnp.float32))

    n_evals = NSTEPS + 1                      # initial v0 + one per step
    flops = 2 * n_evals * B_pad * (D_pad * H_pad + H_pad * D_pad)
    transcendentals = n_evals * B_pad * H_pad
    bytes_accessed = (z_p.size * 4 + w1_p.size * 2 + b1_p.size * 4
                      + w2_p.size * 2 + b2_p.size * 4 + B_pad * D_pad * 4)

    # Right-sized VMEM budget: double-buffered in/out tiles + resident weights
    # and biases, with generous headroom for Mosaic internal scratch.
    tile_bytes = TB * D_pad * 4
    weight_bytes = 2 * D_pad * H_pad * 2
    bias_bytes = 2 * (H_pad + D_pad) * 4
    footprint = 2 * (2 * tile_bytes) + 2 * weight_bytes + bias_bytes
    vmem_limit = int(max(4 * 1024 * 1024, 4 * footprint))

    grid = (B_pad // TB,)
    kernel = functools.partial(_ode_leapfrog_kernel,
                               bf16_act=_use_bf16_activations())

    out_p = pl.pallas_call(
        kernel,
        out_shape=jax.ShapeDtypeStruct((B_pad, D_pad), jnp.float32),
        grid_spec=pltpu.PrefetchScalarGridSpec(
            num_scalar_prefetch=0,
            grid=grid,
            in_specs=[
                pl.BlockSpec((TB, D_pad), lambda i: (i, 0)),      # state tile
                pl.BlockSpec((D_pad, H_pad), lambda i: (0, 0)),   # W1 (resident)
                pl.BlockSpec((1, H_pad), lambda i: (0, 0)),       # b1
                pl.BlockSpec((H_pad, D_pad), lambda i: (0, 0)),   # W2 (resident)
                pl.BlockSpec((1, D_pad), lambda i: (0, 0)),       # b2
            ],
            out_specs=pl.BlockSpec((TB, D_pad), lambda i: (i, 0)),
        ),
        compiler_params=pltpu.CompilerParams(
            dimension_semantics=("parallel",),
            vmem_limit_bytes=vmem_limit,
        ),
        cost_estimate=pl.CostEstimate(
            flops=flops,
            transcendentals=transcendentals,
            bytes_accessed=bytes_accessed,
        ),
    )(z_p, w1_p, b1_p, w2_p, b2_p)

    # Strip padding back to the logical (B, D) result.
    return out_p[:B, :D]


if __name__ == "__main__":
    # Small, deterministic setup: batch=2, seq=8, feature dim D=32, hidden H=64.
    B, S, D, H = 2, 8, 32, 64

    key = jax.random.PRNGKey(0)
    kx, k1, k2, k3, k4 = jax.random.split(key, 5)

    x = jax.random.normal(kx, (B, S, D), dtype=jnp.float32)

    # Deterministic "odefunc" parameters (small scale -> well-behaved ODE).
    w1 = 0.1 * jax.random.normal(k1, (D, H), dtype=jnp.float32)
    b1 = 0.1 * jax.random.normal(k2, (1, H), dtype=jnp.float32)
    w2 = 0.1 * jax.random.normal(k3, (H, D), dtype=jnp.float32)
    b2 = 0.1 * jax.random.normal(k4, (1, D), dtype=jnp.float32)

    out = ode_block_forward(x, w1, b1, w2, b2)
    out = jax.block_until_ready(out)

    assert out.shape == (B, D), out.shape
    assert jnp.all(jnp.isfinite(out))
    print("KERNEL_OK")
</pallas_src>

<mosaic_0001>
module attributes {stable_mosaic.version = 11 : i64} {
  func.func @_ode_leapfrog_kernel(%arg0: i32, %arg1: memref<16x128xf32, #tpu.memory_space<vmem>>, %arg2: memref<128x128xbf16, #tpu.memory_space<vmem>>, %arg3: memref<1x128xf32, #tpu.memory_space<vmem>>, %arg4: memref<128x128xbf16, #tpu.memory_space<vmem>>, %arg5: memref<1x128xf32, #tpu.memory_space<vmem>>, %arg6: memref<16x128xf32, #tpu.memory_space<vmem>>) attributes {dimension_semantics = [#tpu.dimension_semantics<parallel>], iteration_bounds = array<i64: 1>, scalar_prefetch = 0 : i64, scratch_operands = 0 : i64, tpu.core_type = #tpu.core_type<tc>, window_params = [{transform_indices = @transform_0, window_bounds = array<i64: 16, 128>}, {pipeline_mode = #tpu.pipeline_mode<synchronous>, transform_indices = @transform_1, window_bounds = array<i64: 128, 128>}, {pipeline_mode = #tpu.pipeline_mode<synchronous>, transform_indices = @transform_2, window_bounds = array<i64: 1, 128>}, {pipeline_mode = #tpu.pipeline_mode<synchronous>, transform_indices = @transform_3, window_bounds = array<i64: 128, 128>}, {pipeline_mode = #tpu.pipeline_mode<synchronous>, transform_indices = @transform_4, window_bounds = array<i64: 1, 128>}, {transform_indices = @transform_5, window_bounds = array<i64: 16, 128>}]} {
    %c0 = arith.constant 0 : index
    %c0_0 = arith.constant 0 : index
    %0 = vector.load %arg2[%c0, %c0_0] : memref<128x128xbf16, #tpu.memory_space<vmem>>, vector<128x128xbf16>
    %c0_1 = arith.constant 0 : index
    %c0_2 = arith.constant 0 : index
    %1 = vector.load %arg4[%c0_1, %c0_2] : memref<128x128xbf16, #tpu.memory_space<vmem>>, vector<128x128xbf16>
    %c0_3 = arith.constant 0 : index
    %c0_4 = arith.constant 0 : index
    %2 = vector.load %arg3[%c0_3, %c0_4] : memref<1x128xf32, #tpu.memory_space<vmem>>, vector<1x128xf32>
    %c0_5 = arith.constant 0 : index
    %c0_6 = arith.constant 0 : index
    %3 = vector.load %arg5[%c0_5, %c0_6] : memref<1x128xf32, #tpu.memory_space<vmem>>, vector<1x128xf32>
    %c0_7 = arith.constant 0 : index
    %c0_8 = arith.constant 0 : index
    %4 = vector.load %arg1[%c0_7, %c0_8] : memref<16x128xf32, #tpu.memory_space<vmem>>, vector<16x128xf32>
    %5 = arith.truncf %4 : vector<16x128xf32> to vector<16x128xbf16>
    %cst = arith.constant dense<0.000000e+00> : vector<16x128xf32>
    %6 = tpu.matmul %5, %0, %cst {dimension_numbers = #tpu.dot_dimension_numbers<[1], [0], [0], [1], [0, 0, 1, 1], [], []>} : vector<16x128xbf16>, vector<128x128xbf16>, vector<16x128xf32> -> vector<16x128xf32>
    %7 = vector.broadcast %2 : vector<1x128xf32> to vector<16x128xf32>
    %8 = arith.addf %6, %7 : vector<16x128xf32>
    %9 = arith.truncf %8 : vector<16x128xf32> to vector<16x128xbf16>
    %10 = math.tanh %9 : vector<16x128xbf16>
    %cst_9 = arith.constant dense<0.000000e+00> : vector<16x128xf32>
    %11 = tpu.matmul %10, %1, %cst_9 {dimension_numbers = #tpu.dot_dimension_numbers<[1], [0], [0], [1], [0, 0, 1, 1], [], []>} : vector<16x128xbf16>, vector<128x128xbf16>, vector<16x128xf32> -> vector<16x128xf32>
    %12 = vector.broadcast %3 : vector<1x128xf32> to vector<16x128xf32>
    %13 = arith.addf %11, %12 : vector<16x128xf32>
    %cst_10 = arith.constant 6.250000e-02 : f32
    %c0_i32 = arith.constant 0 : i32
    %cst_11 = arith.constant 5.000000e-01 : f32
    %14 = arith.mulf %cst_11, %cst_10 : f32
    %15 = vector.broadcast %14 : f32 to vector<16x128xf32>
    %16 = arith.mulf %15, %13 : vector<16x128xf32>
    %17 = arith.addf %4, %16 : vector<16x128xf32>
    %18 = arith.truncf %17 : vector<16x128xf32> to vector<16x128xbf16>
    %cst_12 = arith.constant dense<0.000000e+00> : vector<16x128xf32>
    %19 = tpu.matmul %18, %0, %cst_12 {dimension_numbers = #tpu.dot_dimension_numbers<[1], [0], [0], [1], [0, 0, 1, 1], [], []>} : vector<16x128xbf16>, vector<128x128xbf16>, vector<16x128xf32> -> vector<16x128xf32>
    %20 = vector.broadcast %2 : vector<1x128xf32> to vector<16x128xf32>
    %21 = arith.addf %19, %20 : vector<16x128xf32>
    %22 = arith.truncf %21 : vector<16x128xf32> to vector<16x128xbf16>
    %23 = math.tanh %22 : vector<16x128xbf16>
    %cst_13 = arith.constant dense<0.000000e+00> : vector<16x128xf32>
    %24 = tpu.matmul %23, %1, %cst_13 {dimension_numbers = #tpu.dot_dimension_numbers<[1], [0], [0], [1], [0, 0, 1, 1], [], []>} : vector<16x128xbf16>, vector<128x128xbf16>, vector<16x128xf32> -> vector<16x128xf32>
    %25 = vector.broadcast %3 : vector<1x128xf32> to vector<16x128xf32>
    %26 = arith.addf %24, %25 : vector<16x128xf32>
    %cst_14 = arith.constant 2.000000e+00 : f32
    %27 = vector.broadcast %cst_14 : f32 to vector<16x128xf32>
    %28 = arith.mulf %27, %26 : vector<16x128xf32>
    %29 = arith.subf %28, %13 : vector<16x128xf32>
    %cst_15 = arith.constant 5.000000e-01 : f32
    %30 = arith.mulf %cst_15, %cst_10 : f32
    %31 = vector.broadcast %30 : f32 to vector<16x128xf32>
    %32 = arith.mulf %31, %29 : vector<16x128xf32>
    %33 = arith.addf %17, %32 : vector<16x128xf32>
    %c1_i32 = arith.constant 1 : i32
    %cst_16 = arith.constant 5.000000e-01 : f32
    %34 = arith.mulf %cst_16, %cst_10 : f32
    %35 = vector.broadcast %34 : f32 to vector<16x128xf32>
    %36 = arith.mulf %35, %29 : vector<16x128xf32>
    %37 = arith.addf %33, %36 : vector<16x128xf32>
    %38 = arith.truncf %37 : vector<16x128xf32> to vector<16x128xbf16>
    %cst_17 = arith.constant dense<0.000000e+00> : vector<16x128xf32>
    %39 = tpu.matmul %38, %0, %cst_17 {dimension_numbers = #tpu.dot_dimension_numbers<[1], [0], [0], [1], [0, 0, 1, 1], [], []>} : vector<16x128xbf16>, vector<128x128xbf16>, vector<16x128xf32> -> vector<16x128xf32>
    %40 = vector.broadcast %2 : vector<1x128xf32> to vector<16x128xf32>
    %41 = arith.addf %39, %40 : vector<16x128xf32>
    %42 = arith.truncf %41 : vector<16x128xf32> to vector<16x128xbf16>
    %43 = math.tanh %42 : vector<16x128xbf16>
    %cst_18 = arith.constant dense<0.000000e+00> : vector<16x128xf32>
    %44 = tpu.matmul %43, %1, %cst_18 {dimension_numbers = #tpu.dot_dimension_numbers<[1], [0], [0], [1], [0, 0, 1, 1], [], []>} : vector<16x128xbf16>, vector<128x128xbf16>, vector<16x128xf32> -> vector<16x128xf32>
    %45 = vector.broadcast %3 : vector<1x128xf32> to vector<16x128xf32>
    %46 = arith.addf %44, %45 : vector<16x128xf32>
    %cst_19 = arith.constant 2.000000e+00 : f32
    %47 = vector.broadcast %cst_19 : f32 to vector<16x128xf32>
    %48 = arith.mulf %47, %46 : vector<16x128xf32>
    %49 = arith.subf %48, %29 : vector<16x128xf32>
    %cst_20 = arith.constant 5.000000e-01 : f32
    %50 = arith.mulf %cst_20, %cst_10 : f32
    %51 = vector.broadcast %50 : f32 to vector<16x128xf32>
    %52 = arith.mulf %51, %49 : vector<16x128xf32>
    %53 = arith.addf %37, %52 : vector<16x128xf32>
    %c2_i32 = arith.constant 2 : i32
    %cst_21 = arith.constant 5.000000e-01 : f32
    %54 = arith.mulf %cst_21, %cst_10 : f32
    %55 = vector.broadcast %54 : f32 to vector<16x128xf32>
    %56 = arith.mulf %55, %49 : vector<16x128xf32>
    %57 = arith.addf %53, %56 : vector<16x128xf32>
    %58 = arith.truncf %57 : vector<16x128xf32> to vector<16x128xbf16>
    %cst_22 = arith.constant dense<0.000000e+00> : vector<16x128xf32>
    %59 = tpu.matmul %58, %0, %cst_22 {dimension_numbers = #tpu.dot_dimension_numbers<[1], [0], [0], [1], [0, 0, 1, 1], [], []>} : vector<16x128xbf16>, vector<128x128xbf16>, vector<16x128xf32> -> vector<16x128xf32>
    %60 = vector.broadcast %2 : vector<1x128xf32> to vector<16x128xf32>
    %61 = arith.addf %59, %60 : vector<16x128xf32>
    %62 = arith.truncf %61 : vector<16x128xf32> to vector<16x128xbf16>
    %63 = math.tanh %62 : vector<16x128xbf16>
    %cst_23 = arith.constant dense<0.000000e+00> : vector<16x128xf32>
    %64 = tpu.matmul %63, %1, %cst_23 {dimension_numbers = #tpu.dot_dimension_numbers<[1], [0], [0], [1], [0, 0, 1, 1], [], []>} : vector<16x128xbf16>, vector<128x128xbf16>, vector<16x128xf32> -> vector<16x128xf32>
    %65 = vector.broadcast %3 : vector<1x128xf32> to vector<16x128xf32>
    %66 = arith.addf %64, %65 : vector<16x128xf32>
    %cst_24 = arith.constant 2.000000e+00 : f32
    %67 = vector.broadcast %cst_24 : f32 to vector<16x128xf32>
    %68 = arith.mulf %67, %66 : vector<16x128xf32>
    %69 = arith.subf %68, %49 : vector<16x128xf32>
    %cst_25 = arith.constant 5.000000e-01 : f32
    %70 = arith.mulf %cst_25, %cst_10 : f32
    %71 = vector.broadcast %70 : f32 to vector<16x128xf32>
    %72 = arith.mulf %71, %69 : vector<16x128xf32>
    %73 = arith.addf %57, %72 : vector<16x128xf32>
    %c3_i32 = arith.constant 3 : i32
    %cst_26 = arith.constant 5.000000e-01 : f32
    %74 = arith.mulf %cst_26, %cst_10 : f32
    %75 = vector.broadcast %74 : f32 to vector<16x128xf32>
    %76 = arith.mulf %75, %69 : vector<16x128xf32>
    %77 = arith.addf %73, %76 : vector<16x128xf32>
    %78 = arith.truncf %77 : vector<16x128xf32> to vector<16x128xbf16>
    %cst_27 = arith.constant dense<0.000000e+00> : vector<16x128xf32>
    %79 = tpu.matmul %78, %0, %cst_27 {dimension_numbers = #tpu.dot_dimension_numbers<[1], [0], [0], [1], [0, 0, 1, 1], [], []>} : vector<16x128xbf16>, vector<128x128xbf16>, vector<16x128xf32> -> vector<16x128xf32>
    %80 = vector.broadcast %2 : vector<1x128xf32> to vector<16x128xf32>
    %81 = arith.addf %79, %80 : vector<16x128xf32>
    %82 = arith.truncf %81 : vector<16x128xf32> to vector<16x128xbf16>
    %83 = math.tanh %82 : vector<16x128xbf16>
    %cst_28 = arith.constant dense<0.000000e+00> : vector<16x128xf32>
    %84 = tpu.matmul %83, %1, %cst_28 {dimension_numbers = #tpu.dot_dimension_numbers<[1], [0], [0], [1], [0, 0, 1, 1], [], []>} : vector<16x128xbf16>, vector<128x128xbf16>, vector<16x128xf32> -> vector<16x128xf32>
    %85 = vector.broadcast %3 : vector<1x128xf32> to vector<16x128xf32>
    %86 = arith.addf %84, %85 : vector<16x128xf32>
    %cst_29 = arith.constant 2.000000e+00 : f32
    %87 = vector.broadcast %cst_29 : f32 to vector<16x128xf32>
    %88 = arith.mulf %87, %86 : vector<16x128xf32>
    %89 = arith.subf %88, %69 : vector<16x128xf32>
    %cst_30 = arith.constant 5.000000e-01 : f32
    %90 = arith.mulf %cst_30, %cst_10 : f32
    %91 = vector.broadcast %90 : f32 to vector<16x128xf32>
    %92 = arith.mulf %91, %89 : vector<16x128xf32>
    %93 = arith.addf %77, %92 : vector<16x128xf32>
    %c4_i32 = arith.constant 4 : i32
    %cst_31 = arith.constant 5.000000e-01 : f32
    %94 = arith.mulf %cst_31, %cst_10 : f32
    %95 = vector.broadcast %94 : f32 to vector<16x128xf32>
    %96 = arith.mulf %95, %89 : vector<16x128xf32>
    %97 = arith.addf %93, %96 : vector<16x128xf32>
    %98 = arith.truncf %97 : vector<16x128xf32> to vector<16x128xbf16>
    %cst_32 = arith.constant dense<0.000000e+00> : vector<16x128xf32>
    %99 = tpu.matmul %98, %0, %cst_32 {dimension_numbers = #tpu.dot_dimension_numbers<[1], [0], [0], [1], [0, 0, 1, 1], [], []>} : vector<16x128xbf16>, vector<128x128xbf16>, vector<16x128xf32> -> vector<16x128xf32>
    %100 = vector.broadcast %2 : vector<1x128xf32> to vector<16x128xf32>
    %101 = arith.addf %99, %100 : vector<16x128xf32>
    %102 = arith.truncf %101 : vector<16x128xf32> to vector<16x128xbf16>
    %103 = math.tanh %102 : vector<16x128xbf16>
    %cst_33 = arith.constant dense<0.000000e+00> : vector<16x128xf32>
    %104 = tpu.matmul %103, %1, %cst_33 {dimension_numbers = #tpu.dot_dimension_numbers<[1], [0], [0], [1], [0, 0, 1, 1], [], []>} : vector<16x128xbf16>, vector<128x128xbf16>, vector<16x128xf32> -> vector<16x128xf32>
    %105 = vector.broadcast %3 : vector<1x128xf32> to vector<16x128xf32>
    %106 = arith.addf %104, %105 : vector<16x128xf32>
    %cst_34 = arith.constant 2.000000e+00 : f32
    %107 = vector.broadcast %cst_34 : f32 to vector<16x128xf32>
    %108 = arith.mulf %107, %106 : vector<16x128xf32>
    %109 = arith.subf %108, %89 : vector<16x128xf32>
    %cst_35 = arith.constant 5.000000e-01 : f32
    %110 = arith.mulf %cst_35, %cst_10 : f32
    %111 = vector.broadcast %110 : f32 to vector<16x128xf32>
    %112 = arith.mulf %111, %109 : vector<16x128xf32>
    %113 = arith.addf %97, %112 : vector<16x128xf32>
    %c5_i32 = arith.constant 5 : i32
    %cst_36 = arith.constant 5.000000e-01 : f32
    %114 = arith.mulf %cst_36, %cst_10 : f32
    %115 = vector.broadcast %114 : f32 to vector<16x128xf32>
    %116 = arith.mulf %115, %109 : vector<16x128xf32>
    %117 = arith.addf %113, %116 : vector<16x128xf32>
    %118 = arith.truncf %117 : vector<16x128xf32> to vector<16x128xbf16>
    %cst_37 = arith.constant dense<0.000000e+00> : vector<16x128xf32>
    %119 = tpu.matmul %118, %0, %cst_37 {dimension_numbers = #tpu.dot_dimension_numbers<[1], [0], [0], [1], [0, 0, 1, 1], [], []>} : vector<16x128xbf16>, vector<128x128xbf16>, vector<16x128xf32> -> vector<16x128xf32>
    %120 = vector.broadcast %2 : vector<1x128xf32> to vector<16x128xf32>
    %121 = arith.addf %119, %120 : vector<16x128xf32>
    %122 = arith.truncf %121 : vector<16x128xf32> to vector<16x128xbf16>
    %123 = math.tanh %122 : vector<16x128xbf16>
    %cst_38 = arith.constant dense<0.000000e+00> : vector<16x128xf32>
    %124 = tpu.matmul %123, %1, %cst_38 {dimension_numbers = #tpu.dot_dimension_numbers<[1], [0], [0], [1], [0, 0, 1, 1], [], []>} : vector<16x128xbf16>, vector<128x128xbf16>, vector<16x128xf32> -> vector<16x128xf32>
    %125 = vector.broadcast %3 : vector<1x128xf32> to vector<16x128xf32>
    %126 = arith.addf %124, %125 : vector<16x128xf32>
    %cst_39 = arith.constant 2.000000e+00 : f32
    %127 = vector.broadcast %cst_39 : f32 to vector<16x128xf32>
    %128 = arith.mulf %127, %126 : vector<16x128xf32>
    %129 = arith.subf %128, %109 : vector<16x128xf32>
    %cst_40 = arith.constant 5.000000e-01 : f32
    %130 = arith.mulf %cst_40, %cst_10 : f32
    %131 = vector.broadcast %130 : f32 to vector<16x128xf32>
    %132 = arith.mulf %131, %129 : vector<16x128xf32>
    %133 = arith.addf %117, %132 : vector<16x128xf32>
    %c6_i32 = arith.constant 6 : i32
    %cst_41 = arith.constant 5.000000e-01 : f32
    %134 = arith.mulf %cst_41, %cst_10 : f32
    %135 = vector.broadcast %134 : f32 to vector<16x128xf32>
    %136 = arith.mulf %135, %129 : vector<16x128xf32>
    %137 = arith.addf %133, %136 : vector<16x128xf32>
    %138 = arith.truncf %137 : vector<16x128xf32> to vector<16x128xbf16>
    %cst_42 = arith.constant dense<0.000000e+00> : vector<16x128xf32>
    %139 = tpu.matmul %138, %0, %cst_42 {dimension_numbers = #tpu.dot_dimension_numbers<[1], [0], [0], [1], [0, 0, 1, 1], [], []>} : vector<16x128xbf16>, vector<128x128xbf16>, vector<16x128xf32> -> vector<16x128xf32>
    %140 = vector.broadcast %2 : vector<1x128xf32> to vector<16x128xf32>
    %141 = arith.addf %139, %140 : vector<16x128xf32>
    %142 = arith.truncf %141 : vector<16x128xf32> to vector<16x128xbf16>
    %143 = math.tanh %142 : vector<16x128xbf16>
    %cst_43 = arith.constant dense<0.000000e+00> : vector<16x128xf32>
    %144 = tpu.matmul %143, %1, %cst_43 {dimension_numbers = #tpu.dot_dimension_numbers<[1], [0], [0], [1], [0, 0, 1, 1], [], []>} : vector<16x128xbf16>, vector<128x128xbf16>, vector<16x128xf32> -> vector<16x128xf32>
    %145 = vector.broadcast %3 : vector<1x128xf32> to vector<16x128xf32>
    %146 = arith.addf %144, %145 : vector<16x128xf32>
    %cst_44 = arith.constant 2.000000e+00 : f32
    %147 = vector.broadcast %cst_44 : f32 to vector<16x128xf32>
    %148 = arith.mulf %147, %146 : vector<16x128xf32>
    %149 = arith.subf %148, %129 : vector<16x128xf32>
    %cst_45 = arith.constant 5.000000e-01 : f32
    %150 = arith.mulf %cst_45, %cst_10 : f32
    %151 = vector.broadcast %150 : f32 to vector<16x128xf32>
    %152 = arith.mulf %151, %149 : vector<16x128xf32>
    %153 = arith.addf %137, %152 : vector<16x128xf32>
    %c7_i32 = arith.constant 7 : i32
    %cst_46 = arith.constant 5.000000e-01 : f32
    %154 = arith.mulf %cst_46, %cst_10 : f32
    %155 = vector.broadcast %154 : f32 to vector<16x128xf32>
    %156 = arith.mulf %155, %149 : vector<16x128xf32>
    %157 = arith.addf %153, %156 : vector<16x128xf32>
    %158 = arith.truncf %157 : vector<16x128xf32> to vector<16x128xbf16>
    %cst_47 = arith.constant dense<0.000000e+00> : vector<16x128xf32>
    %159 = tpu.matmul %158, %0, %cst_47 {dimension_numbers = #tpu.dot_dimension_numbers<[1], [0], [0], [1], [0, 0, 1, 1], [], []>} : vector<16x128xbf16>, vector<128x128xbf16>, vector<16x128xf32> -> vector<16x128xf32>
    %160 = vector.broadcast %2 : vector<1x128xf32> to vector<16x128xf32>
    %161 = arith.addf %159, %160 : vector<16x128xf32>
    %162 = arith.truncf %161 : vector<16x128xf32> to vector<16x128xbf16>
    %163 = math.tanh %162 : vector<16x128xbf16>
    %cst_48 = arith.constant dense<0.000000e+00> : vector<16x128xf32>
    %164 = tpu.matmul %163, %1, %cst_48 {dimension_numbers = #tpu.dot_dimension_numbers<[1], [0], [0], [1], [0, 0, 1, 1], [], []>} : vector<16x128xbf16>, vector<128x128xbf16>, vector<16x128xf32> -> vector<16x128xf32>
    %165 = vector.broadcast %3 : vector<1x128xf32> to vector<16x128xf32>
    %166 = arith.addf %164, %165 : vector<16x128xf32>
    %cst_49 = arith.constant 2.000000e+00 : f32
    %167 = vector.broadcast %cst_49 : f32 to vector<16x128xf32>
    %168 = arith.mulf %167, %166 : vector<16x128xf32>
    %169 = arith.subf %168, %149 : vector<16x128xf32>
    %cst_50 = arith.constant 5.000000e-01 : f32
    %170 = arith.mulf %cst_50, %cst_10 : f32
    %171 = vector.broadcast %170 : f32 to vector<16x128xf32>
    %172 = arith.mulf %171, %169 : vector<16x128xf32>
    %173 = arith.addf %157, %172 : vector<16x128xf32>
    %c8_i32 = arith.constant 8 : i32
    %cst_51 = arith.constant 5.000000e-01 : f32
    %174 = arith.mulf %cst_51, %cst_10 : f32
    %175 = vector.broadcast %174 : f32 to vector<16x128xf32>
    %176 = arith.mulf %175, %169 : vector<16x128xf32>
    %177 = arith.addf %173, %176 : vector<16x128xf32>
    %178 = arith.truncf %177 : vector<16x128xf32> to vector<16x128xbf16>
    %cst_52 = arith.constant dense<0.000000e+00> : vector<16x128xf32>
    %179 = tpu.matmul %178, %0, %cst_52 {dimension_numbers = #tpu.dot_dimension_numbers<[1], [0], [0], [1], [0, 0, 1, 1], [], []>} : vector<16x128xbf16>, vector<128x128xbf16>, vector<16x128xf32> -> vector<16x128xf32>
    %180 = vector.broadcast %2 : vector<1x128xf32> to vector<16x128xf32>
    %181 = arith.addf %179, %180 : vector<16x128xf32>
    %182 = arith.truncf %181 : vector<16x128xf32> to vector<16x128xbf16>
    %183 = math.tanh %182 : vector<16x128xbf16>
    %cst_53 = arith.constant dense<0.000000e+00> : vector<16x128xf32>
    %184 = tpu.matmul %183, %1, %cst_53 {dimension_numbers = #tpu.dot_dimension_numbers<[1], [0], [0], [1], [0, 0, 1, 1], [], []>} : vector<16x128xbf16>, vector<128x128xbf16>, vector<16x128xf32> -> vector<16x128xf32>
    %185 = vector.broadcast %3 : vector<1x128xf32> to vector<16x128xf32>
    %186 = arith.addf %184, %185 : vector<16x128xf32>
    %cst_54 = arith.constant 2.000000e+00 : f32
    %187 = vector.broadcast %cst_54 : f32 to vector<16x128xf32>
    %188 = arith.mulf %187, %186 : vector<16x128xf32>
    %189 = arith.subf %188, %169 : vector<16x128xf32>
    %cst_55 = arith.constant 5.000000e-01 : f32
    %190 = arith.mulf %cst_55, %cst_10 : f32
    %191 = vector.broadcast %190 : f32 to vector<16x128xf32>
    %192 = arith.mulf %191, %189 : vector<16x128xf32>
    %193 = arith.addf %177, %192 : vector<16x128xf32>
    %c9_i32 = arith.constant 9 : i32
    %cst_56 = arith.constant 5.000000e-01 : f32
    %194 = arith.mulf %cst_56, %cst_10 : f32
    %195 = vector.broadcast %194 : f32 to vector<16x128xf32>
    %196 = arith.mulf %195, %189 : vector<16x128xf32>
    %197 = arith.addf %193, %196 : vector<16x128xf32>
    %198 = arith.truncf %197 : vector<16x128xf32> to vector<16x128xbf16>
    %cst_57 = arith.constant dense<0.000000e+00> : vector<16x128xf32>
    %199 = tpu.matmul %198, %0, %cst_57 {dimension_numbers = #tpu.dot_dimension_numbers<[1], [0], [0], [1], [0, 0, 1, 1], [], []>} : vector<16x128xbf16>, vector<128x128xbf16>, vector<16x128xf32> -> vector<16x128xf32>
    %200 = vector.broadcast %2 : vector<1x128xf32> to vector<16x128xf32>
    %201 = arith.addf %199, %200 : vector<16x128xf32>
    %202 = arith.truncf %201 : vector<16x128xf32> to vector<16x128xbf16>
    %203 = math.tanh %202 : vector<16x128xbf16>
    %cst_58 = arith.constant dense<0.000000e+00> : vector<16x128xf32>
    %204 = tpu.matmul %203, %1, %cst_58 {dimension_numbers = #tpu.dot_dimension_numbers<[1], [0], [0], [1], [0, 0, 1, 1], [], []>} : vector<16x128xbf16>, vector<128x128xbf16>, vector<16x128xf32> -> vector<16x128xf32>
    %205 = vector.broadcast %3 : vector<1x128xf32> to vector<16x128xf32>
    %206 = arith.addf %204, %205 : vector<16x128xf32>
    %cst_59 = arith.constant 2.000000e+00 : f32
    %207 = vector.broadcast %cst_59 : f32 to vector<16x128xf32>
    %208 = arith.mulf %207, %206 : vector<16x128xf32>
    %209 = arith.subf %208, %189 : vector<16x128xf32>
    %cst_60 = arith.constant 5.000000e-01 : f32
    %210 = arith.mulf %cst_60, %cst_10 : f32
    %211 = vector.broadcast %210 : f32 to vector<16x128xf32>
    %212 = arith.mulf %211, %209 : vector<16x128xf32>
    %213 = arith.addf %197, %212 : vector<16x128xf32>
    %c10_i32 = arith.constant 10 : i32
    %cst_61 = arith.constant 5.000000e-01 : f32
    %214 = arith.mulf %cst_61, %cst_10 : f32
    %215 = vector.broadcast %214 : f32 to vector<16x128xf32>
    %216 = arith.mulf %215, %209 : vector<16x128xf32>
    %217 = arith.addf %213, %216 : vector<16x128xf32>
    %218 = arith.truncf %217 : vector<16x128xf32> to vector<16x128xbf16>
    %cst_62 = arith.constant dense<0.000000e+00> : vector<16x128xf32>
    %219 = tpu.matmul %218, %0, %cst_62 {dimension_numbers = #tpu.dot_dimension_numbers<[1], [0], [0], [1], [0, 0, 1, 1], [], []>} : vector<16x128xbf16>, vector<128x128xbf16>, vector<16x128xf32> -> vector<16x128xf32>
    %220 = vector.broadcast %2 : vector<1x128xf32> to vector<16x128xf32>
    %221 = arith.addf %219, %220 : vector<16x128xf32>
    %222 = arith.truncf %221 : vector<16x128xf32> to vector<16x128xbf16>
    %223 = math.tanh %222 : vector<16x128xbf16>
    %cst_63 = arith.constant dense<0.000000e+00> : vector<16x128xf32>
    %224 = tpu.matmul %223, %1, %cst_63 {dimension_numbers = #tpu.dot_dimension_numbers<[1], [0], [0], [1], [0, 0, 1, 1], [], []>} : vector<16x128xbf16>, vector<128x128xbf16>, vector<16x128xf32> -> vector<16x128xf32>
    %225 = vector.broadcast %3 : vector<1x128xf32> to vector<16x128xf32>
    %226 = arith.addf %224, %225 : vector<16x128xf32>
    %cst_64 = arith.constant 2.000000e+00 : f32
    %227 = vector.broadcast %cst_64 : f32 to vector<16x128xf32>
    %228 = arith.mulf %227, %226 : vector<16x128xf32>
    %229 = arith.subf %228, %209 : vector<16x128xf32>
    %cst_65 = arith.constant 5.000000e-01 : f32
    %230 = arith.mulf %cst_65, %cst_10 : f32
    %231 = vector.broadcast %230 : f32 to vector<16x128xf32>
    %232 = arith.mulf %231, %229 : vector<16x128xf32>
    %233 = arith.addf %217, %232 : vector<16x128xf32>
    %c11_i32 = arith.constant 11 : i32
    %cst_66 = arith.constant 5.000000e-01 : f32
    %234 = arith.mulf %cst_66, %cst_10 : f32
    %235 = vector.broadcast %234 : f32 to vector<16x128xf32>
    %236 = arith.mulf %235, %229 : vector<16x128xf32>
    %237 = arith.addf %233, %236 : vector<16x128xf32>
    %238 = arith.truncf %237 : vector<16x128xf32> to vector<16x128xbf16>
    %cst_67 = arith.constant dense<0.000000e+00> : vector<16x128xf32>
    %239 = tpu.matmul %238, %0, %cst_67 {dimension_numbers = #tpu.dot_dimension_numbers<[1], [0], [0], [1], [0, 0, 1, 1], [], []>} : vector<16x128xbf16>, vector<128x128xbf16>, vector<16x128xf32> -> vector<16x128xf32>
    %240 = vector.broadcast %2 : vector<1x128xf32> to vector<16x128xf32>
    %241 = arith.addf %239, %240 : vector<16x128xf32>
    %242 = arith.truncf %241 : vector<16x128xf32> to vector<16x128xbf16>
    %243 = math.tanh %242 : vector<16x128xbf16>
    %cst_68 = arith.constant dense<0.000000e+00> : vector<16x128xf32>
    %244 = tpu.matmul %243, %1, %cst_68 {dimension_numbers = #tpu.dot_dimension_numbers<[1], [0], [0], [1], [0, 0, 1, 1], [], []>} : vector<16x128xbf16>, vector<128x128xbf16>, vector<16x128xf32> -> vector<16x128xf32>
    %245 = vector.broadcast %3 : vector<1x128xf32> to vector<16x128xf32>
    %246 = arith.addf %244, %245 : vector<16x128xf32>
    %cst_69 = arith.constant 2.000000e+00 : f32
    %247 = vector.broadcast %cst_69 : f32 to vector<16x128xf32>
    %248 = arith.mulf %247, %246 : vector<16x128xf32>
    %249 = arith.subf %248, %229 : vector<16x128xf32>
    %cst_70 = arith.constant 5.000000e-01 : f32
    %250 = arith.mulf %cst_70, %cst_10 : f32
    %251 = vector.broadcast %250 : f32 to vector<16x128xf32>
    %252 = arith.mulf %251, %249 : vector<16x128xf32>
    %253 = arith.addf %237, %252 : vector<16x128xf32>
    %c12_i32 = arith.constant 12 : i32
    %cst_71 = arith.constant 5.000000e-01 : f32
    %254 = arith.mulf %cst_71, %cst_10 : f32
    %255 = vector.broadcast %254 : f32 to vector<16x128xf32>
    %256 = arith.mulf %255, %249 : vector<16x128xf32>
    %257 = arith.addf %253, %256 : vector<16x128xf32>
    %258 = arith.truncf %257 : vector<16x128xf32> to vector<16x128xbf16>
    %cst_72 = arith.constant dense<0.000000e+00> : vector<16x128xf32>
    %259 = tpu.matmul %258, %0, %cst_72 {dimension_numbers = #tpu.dot_dimension_numbers<[1], [0], [0], [1], [0, 0, 1, 1], [], []>} : vector<16x128xbf16>, vector<128x128xbf16>, vector<16x128xf32> -> vector<16x128xf32>
    %260 = vector.broadcast %2 : vector<1x128xf32> to vector<16x128xf32>
    %261 = arith.addf %259, %260 : vector<16x128xf32>
    %262 = arith.truncf %261 : vector<16x128xf32> to vector<16x128xbf16>
    %263 = math.tanh %262 : vector<16x128xbf16>
    %cst_73 = arith.constant dense<0.000000e+00> : vector<16x128xf32>
    %264 = tpu.matmul %263, %1, %cst_73 {dimension_numbers = #tpu.dot_dimension_numbers<[1], [0], [0], [1], [0, 0, 1, 1], [], []>} : vector<16x128xbf16>, vector<128x128xbf16>, vector<16x128xf32> -> vector<16x128xf32>
    %265 = vector.broadcast %3 : vector<1x128xf32> to vector<16x128xf32>
    %266 = arith.addf %264, %265 : vector<16x128xf32>
    %cst_74 = arith.constant 2.000000e+00 : f32
    %267 = vector.broadcast %cst_74 : f32 to vector<16x128xf32>
    %268 = arith.mulf %267, %266 : vector<16x128xf32>
    %269 = arith.subf %268, %249 : vector<16x128xf32>
    %cst_75 = arith.constant 5.000000e-01 : f32
    %270 = arith.mulf %cst_75, %cst_10 : f32
    %271 = vector.broadcast %270 : f32 to vector<16x128xf32>
    %272 = arith.mulf %271, %269 : vector<16x128xf32>
    %273 = arith.addf %257, %272 : vector<16x128xf32>
    %c13_i32 = arith.constant 13 : i32
    %cst_76 = arith.constant 5.000000e-01 : f32
    %274 = arith.mulf %cst_76, %cst_10 : f32
    %275 = vector.broadcast %274 : f32 to vector<16x128xf32>
    %276 = arith.mulf %275, %269 : vector<16x128xf32>
    %277 = arith.addf %273, %276 : vector<16x128xf32>
    %278 = arith.truncf %277 : vector<16x128xf32> to vector<16x128xbf16>
    %cst_77 = arith.constant dense<0.000000e+00> : vector<16x128xf32>
    %279 = tpu.matmul %278, %0, %cst_77 {dimension_numbers = #tpu.dot_dimension_numbers<[1], [0], [0], [1], [0, 0, 1, 1], [], []>} : vector<16x128xbf16>, vector<128x128xbf16>, vector<16x128xf32> -> vector<16x128xf32>
    %280 = vector.broadcast %2 : vector<1x128xf32> to vector<16x128xf32>
    %281 = arith.addf %279, %280 : vector<16x128xf32>
    %282 = arith.truncf %281 : vector<16x128xf32> to vector<16x128xbf16>
    %283 = math.tanh %282 : vector<16x128xbf16>
    %cst_78 = arith.constant dense<0.000000e+00> : vector<16x128xf32>
    %284 = tpu.matmul %283, %1, %cst_78 {dimension_numbers = #tpu.dot_dimension_numbers<[1], [0], [0], [1], [0, 0, 1, 1], [], []>} : vector<16x128xbf16>, vector<128x128xbf16>, vector<16x128xf32> -> vector<16x128xf32>
    %285 = vector.broadcast %3 : vector<1x128xf32> to vector<16x128xf32>
    %286 = arith.addf %284, %285 : vector<16x128xf32>
    %cst_79 = arith.constant 2.000000e+00 : f32
    %287 = vector.broadcast %cst_79 : f32 to vector<16x128xf32>
    %288 = arith.mulf %287, %286 : vector<16x128xf32>
    %289 = arith.subf %288, %269 : vector<16x128xf32>
    %cst_80 = arith.constant 5.000000e-01 : f32
    %290 = arith.mulf %cst_80, %cst_10 : f32
    %291 = vector.broadcast %290 : f32 to vector<16x128xf32>
    %292 = arith.mulf %291, %289 : vector<16x128xf32>
    %293 = arith.addf %277, %292 : vector<16x128xf32>
    %c14_i32 = arith.constant 14 : i32
    %cst_81 = arith.constant 5.000000e-01 : f32
    %294 = arith.mulf %cst_81, %cst_10 : f32
    %295 = vector.broadcast %294 : f32 to vector<16x128xf32>
    %296 = arith.mulf %295, %289 : vector<16x128xf32>
    %297 = arith.addf %293, %296 : vector<16x128xf32>
    %298 = arith.truncf %297 : vector<16x128xf32> to vector<16x128xbf16>
    %cst_82 = arith.constant dense<0.000000e+00> : vector<16x128xf32>
    %299 = tpu.matmul %298, %0, %cst_82 {dimension_numbers = #tpu.dot_dimension_numbers<[1], [0], [0], [1], [0, 0, 1, 1], [], []>} : vector<16x128xbf16>, vector<128x128xbf16>, vector<16x128xf32> -> vector<16x128xf32>
    %300 = vector.broadcast %2 : vector<1x128xf32> to vector<16x128xf32>
    %301 = arith.addf %299, %300 : vector<16x128xf32>
    %302 = arith.truncf %301 : vector<16x128xf32> to vector<16x128xbf16>
    %303 = math.tanh %302 : vector<16x128xbf16>
    %cst_83 = arith.constant dense<0.000000e+00> : vector<16x128xf32>
    %304 = tpu.matmul %303, %1, %cst_83 {dimension_numbers = #tpu.dot_dimension_numbers<[1], [0], [0], [1], [0, 0, 1, 1], [], []>} : vector<16x128xbf16>, vector<128x128xbf16>, vector<16x128xf32> -> vector<16x128xf32>
    %305 = vector.broadcast %3 : vector<1x128xf32> to vector<16x128xf32>
    %306 = arith.addf %304, %305 : vector<16x128xf32>
    %cst_84 = arith.constant 2.000000e+00 : f32
    %307 = vector.broadcast %cst_84 : f32 to vector<16x128xf32>
    %308 = arith.mulf %307, %306 : vector<16x128xf32>
    %309 = arith.subf %308, %289 : vector<16x128xf32>
    %cst_85 = arith.constant 5.000000e-01 : f32
    %310 = arith.mulf %cst_85, %cst_10 : f32
    %311 = vector.broadcast %310 : f32 to vector<16x128xf32>
    %312 = arith.mulf %311, %309 : vector<16x128xf32>
    %313 = arith.addf %297, %312 : vector<16x128xf32>
    %c15_i32 = arith.constant 15 : i32
    %cst_86 = arith.constant 5.000000e-01 : f32
    %314 = arith.mulf %cst_86, %cst_10 : f32
    %315 = vector.broadcast %314 : f32 to vector<16x128xf32>
    %316 = arith.mulf %315, %309 : vector<16x128xf32>
    %317 = arith.addf %313, %316 : vector<16x128xf32>
    %318 = arith.truncf %317 : vector<16x128xf32> to vector<16x128xbf16>
    %cst_87 = arith.constant dense<0.000000e+00> : vector<16x128xf32>
    %319 = tpu.matmul %318, %0, %cst_87 {dimension_numbers = #tpu.dot_dimension_numbers<[1], [0], [0], [1], [0, 0, 1, 1], [], []>} : vector<16x128xbf16>, vector<128x128xbf16>, vector<16x128xf32> -> vector<16x128xf32>
    %320 = vector.broadcast %2 : vector<1x128xf32> to vector<16x128xf32>
    %321 = arith.addf %319, %320 : vector<16x128xf32>
    %322 = arith.truncf %321 : vector<16x128xf32> to vector<16x128xbf16>
    %323 = math.tanh %322 : vector<16x128xbf16>
    %cst_88 = arith.constant dense<0.000000e+00> : vector<16x128xf32>
    %324 = tpu.matmul %323, %1, %cst_88 {dimension_numbers = #tpu.dot_dimension_numbers<[1], [0], [0], [1], [0, 0, 1, 1], [], []>} : vector<16x128xbf16>, vector<128x128xbf16>, vector<16x128xf32> -> vector<16x128xf32>
    %325 = vector.broadcast %3 : vector<1x128xf32> to vector<16x128xf32>
    %326 = arith.addf %324, %325 : vector<16x128xf32>
    %cst_89 = arith.constant 2.000000e+00 : f32
    %327 = vector.broadcast %cst_89 : f32 to vector<16x128xf32>
    %328 = arith.mulf %327, %326 : vector<16x128xf32>
    %329 = arith.subf %328, %309 : vector<16x128xf32>
    %cst_90 = arith.constant 5.000000e-01 : f32
    %330 = arith.mulf %cst_90, %cst_10 : f32
    %331 = vector.broadcast %330 : f32 to vector<16x128xf32>
    %332 = arith.mulf %331, %329 : vector<16x128xf32>
    %333 = arith.addf %317, %332 : vector<16x128xf32>
    %c0_91 = arith.constant 0 : index
    %c0_92 = arith.constant 0 : index
    %334 = vector.load %arg6[%c0_91, %c0_92] : memref<16x128xf32, #tpu.memory_space<vmem>>, vector<16x128xf32>
    tpu.vector_store %arg6[%c0_91, %c0_92], %333 {strides = array<i32>} : memref<16x128xf32, #tpu.memory_space<vmem>>, vector<16x128xf32>,
    return
  }
  func.func @transform_0(%arg0: i32) -> (i32, i32) {
    %c0_i32 = arith.constant 0 : i32
    %c0_i32_0 = arith.constant 0 : i32
    return %arg0, %c0_i32 : i32, i32
  }
  func.func @transform_1(%arg0: i32) -> (i32, i32) {
    %c0_i32 = arith.constant 0 : i32
    %c0_i32_0 = arith.constant 0 : i32
    %c0_i32_1 = arith.constant 0 : i32
    return %c0_i32, %c0_i32_0 : i32, i32
  }
  func.func @transform_2(%arg0: i32) -> (i32, i32) {
    %c0_i32 = arith.constant 0 : i32
    %c0_i32_0 = arith.constant 0 : i32
    %c0_i32_1 = arith.constant 0 : i32
    return %c0_i32, %c0_i32_0 : i32, i32
  }
  func.func @transform_3(%arg0: i32) -> (i32, i32) {
    %c0_i32 = arith.constant 0 : i32
    %c0_i32_0 = arith.constant 0 : i32
    %c0_i32_1 = arith.constant 0 : i32
    return %c0_i32, %c0_i32_0 : i32, i32
  }
  func.func @transform_4(%arg0: i32) -> (i32, i32) {
    %c0_i32 = arith.constant 0 : i32
    %c0_i32_0 = arith.constant 0 : i32
    %c0_i32_1 = arith.constant 0 : i32
    return %c0_i32, %c0_i32_0 : i32, i32
  }
  func.func @transform_5(%arg0: i32) -> (i32, i32) {
    %c0_i32 = arith.constant 0 : i32
    %c0_i32_0 = arith.constant 0 : i32
    return %arg0, %c0_i32 : i32, i32
  }
}

</mosaic_0001>

<llo_original>
// kernel: tpu_custom_call.1
$region0: #{tpu_custom_call.1}
  #allocation0 [shape = 'u32[]', space=smem, size = 0x4, offset = 0x4, fixed_abs, tag = 'smem constant byte address 0x4 - core index']
  #allocation1 [shape = 'u32[144,128]{1,0:T(1,128)}', space=vmem, size = 0x12000, scoped, tag = 'internal scratch']
  %s0 = inlined_call_operand.hbm [shape: f32[16,128], index: 0, kind: input, shape index: {}]
  %s1 = inlined_call_operand.hbm [shape: bf16[128,128], index: 1, kind: input, shape index: {}]
  %s2 = inlined_call_operand.vmem [shape: f32[1,128], index: 2, kind: input, shape index: {}]
  %s3 = inlined_call_operand.hbm [shape: bf16[128,128], index: 3, kind: input, shape index: {}]
  %s4 = inlined_call_operand.vmem [shape: f32[1,128], index: 4, kind: input, shape index: {}]
  %s5 = inlined_call_operand.hbm [shape: f32[16,128], index: 5, kind: output, shape index: {}]
  %s6 = sld [smem:[#allocation0]]
  $region42: #{tpu_custom_call.1} parent=0
    _
  %s8 = ssub.s32 1, %s6
  %s9 = scalar_select 0, %s8, %s6
  $region1: #{tpu_custom_call.1} parent=0
    #allocation2 [shape = 'u8[8192]{0}', space=vmem, size = 0x2000, scoped, tag = 'input window, operand 0, single buffered']
    #allocation3 [shape = 's32[1]{0}', space=sflag, size = 0x4, scoped, tag = 'scoped memory for tpu_custom_call.1']
    #allocation4 [shape = 's32[1]{0}', space=sflag, size = 0x4, scoped, tag = 'scoped memory for tpu_custom_call.1']
    #allocation5 [shape = 'u8[32768]{0}', space=vmem, size = 0x8000, scoped, tag = 'input window, operand 1, single buffered']
    #allocation6 [shape = 's32[1]{0}', space=sflag, size = 0x4, scoped, tag = 'scoped memory for tpu_custom_call.1']
    #allocation7 [shape = 'u8[32768]{0}', space=vmem, size = 0x8000, scoped, tag = 'input window, operand 3, single buffered']
    #allocation8 [shape = 'u8[8192]{0}', space=vmem, size = 0x2000, scoped, tag = 'output window, operand 0, single buffered']
    %10 = vsyncpa [#allocation3], 0
    %11 = vsyncpa [#allocation6], 0
    %12 = vsyncpa [#allocation4], 0
    // Predicated region
    $region2: #{tpu_custom_call.1} parent=1 // pred_check
      _
    $region3: #{tpu_custom_call.1} parent=1 // pred_check_branch
      %14 = sbr.rel (0) target = $region5
    $region4: #{tpu_custom_call.1} parent=1 // pred_region
      %s16 = ssub.s32 256, 256
      %17 = vsyncadd [#allocation3], %s16
      %s18 = sshll.u32 [#allocation2], 4
      %s19 = int_to_ptr.vmem [resolvable:$true] %s18
      %24 = dma.hbm_to_vmem [thread:$0]  %s0, 256, %s19, [#allocation3], 128, 128, 8
    $region5: #{tpu_custom_call.1} parent=1 // pred_fallthru
      _
    // Predicated region
    $region6: #{tpu_custom_call.1} parent=1 // pred_check
      _
    $region7: #{tpu_custom_call.1} parent=1 // pred_check_branch
      %26 = sbr.rel (0) target = $region9
    $region8: #{tpu_custom_call.1} parent=1 // pred_region
      %s28 = ssub.s32 1024, 1024
      %29 = vsyncadd [#allocation6], %s28
      %s30 = sshll.u32 [#allocation5], 4
      %s31 = int_to_ptr.vmem [resolvable:$true] %s30
      %36 = dma.hbm_to_vmem [thread:$0]  %s1, 1024, %s31, [#allocation6], 64, 64, 4
    $region9: #{tpu_custom_call.1} parent=1 // pred_fallthru
      _
    // Predicated region
    $region10: #{tpu_custom_call.1} parent=1 // pred_check
      _
    $region11: #{tpu_custom_call.1} parent=1 // pred_check_branch
      %38 = sbr.rel (0) target = $region13
    $region12: #{tpu_custom_call.1} parent=1 // pred_region
      _
    $region13: #{tpu_custom_call.1} parent=1 // pred_fallthru
      _
    // Predicated region
    $region14: #{tpu_custom_call.1} parent=1 // pred_check
      _
    $region15: #{tpu_custom_call.1} parent=1 // pred_check_branch
      %40 = sbr.rel (0) target = $region17
    $region16: #{tpu_custom_call.1} parent=1 // pred_region
      %s42 = ssub.s32 1024, 1024
      %43 = vsyncadd [#allocation6], %s42
      %s44 = sshll.u32 [#allocation7], 4
      %s45 = int_to_ptr.vmem [resolvable:$true] %s44
      %50 = dma.hbm_to_vmem [thread:$0]  %s3, 1024, %s45, [#allocation6], 64, 64, 4
    $region17: #{tpu_custom_call.1} parent=1 // pred_fallthru
      _
    // Predicated region
    $region18: #{tpu_custom_call.1} parent=1 // pred_check
      _
    $region19: #{tpu_custom_call.1} parent=1 // pred_check_branch
      %52 = sbr.rel (0) target = $region21
    $region20: #{tpu_custom_call.1} parent=1 // pred_region
      _
    $region21: #{tpu_custom_call.1} parent=1 // pred_fallthru
      _
    // Predicated region
    $region22: #{tpu_custom_call.1} parent=1 // pred_check
      _
    $region23: #{tpu_custom_call.1} parent=1 // pred_check_branch
      %54 = sbr.rel (0) target = $region25
    $region24: #{tpu_custom_call.1} parent=1 // pred_region
      %55 = dma.done [#allocation3], 256
    $region25: #{tpu_custom_call.1} parent=1 // pred_fallthru
      _
    // Predicated region
    $region26: #{tpu_custom_call.1} parent=1 // pred_check
      _
    $region27: #{tpu_custom_call.1} parent=1 // pred_check_branch
      %57 = sbr.rel (0) target = $region29
    $region28: #{tpu_custom_call.1} parent=1 // pred_region
      %58 = dma.done [#allocation6], 1024
    $region29: #{tpu_custom_call.1} parent=1 // pred_fallthru
      _
    // Predicated region
    $region30: #{tpu_custom_call.1} parent=1 // pred_check
      _
    $region31: #{tpu_custom_call.1} parent=1 // pred_check_branch
      %60 = sbr.rel (0) target = $region33
    $region32: #{tpu_custom_call.1} parent=1 // pred_region
      %61 = dma.done [#allocation6], 1024
    $region33: #{tpu_custom_call.1} parent=1 // pred_fallthru
      _
    %v63 = vld [vmem:[#allocation5] sm:$0xf]
    %v64 = vld [vmem:[#allocation5 + $0x4] sm:$0xf]
    %v65 = vld [vmem:[#allocation5 + $0x8] sm:$0xf]
    %v66 = vld [vmem:[#allocation5 + $0xc] sm:$0xf]
    %v67 = vld [vmem:[#allocation5 + $0x10] sm:$0xf]
    %v68 = vld [vmem:[#allocation5 + $0x14] sm:$0xf]
    %v69 = vld [vmem:[#allocation5 + $0x18] sm:$0xf]
    %v70 = vld [vmem:[#allocation5 + $0x1c] sm:$0xf]
    %v71 = vld [vmem:[#allocation5 + $0x20] sm:$0xf]
    %v72 = vld [vmem:[#allocation5 + $0x24] sm:$0xf]
    %v73 = vld [vmem:[#allocation5 + $0x28] sm:$0xf]
    %v74 = vld [vmem:[#allocation5 + $0x2c] sm:$0xf]
    %v75 = vld [vmem:[#allocation5 + $0x30] sm:$0xf]
    %v76 = vld [vmem:[#allocation5 + $0x34] sm:$0xf]
    %v77 = vld [vmem:[#allocation5 + $0x38] sm:$0xf]
    %v78 = vld [vmem:[#allocation5 + $0x3c] sm:$0xf]
    %v79 = vld [vmem:[#allocation7] sm:$0xf]
    %v80 = vld [vmem:[#allocation7 + $0x4] sm:$0xf]
    %v81 = vld [vmem:[#allocation7 + $0x8] sm:$0xf]
    %v82 = vld [vmem:[#allocation7 + $0xc] sm:$0xf]
    %v83 = vld [vmem:[#allocation7 + $0x10] sm:$0xf]
    %v84 = vld [vmem:[#allocation7 + $0x14] sm:$0xf]
    %v85 = vld [vmem:[#allocation7 + $0x18] sm:$0xf]
    %v86 = vld [vmem:[#allocation7 + $0x1c] sm:$0xf]
    %v87 = vld [vmem:[#allocation7 + $0x20] sm:$0xf]
    %v88 = vld [vmem:[#allocation7 + $0x24] sm:$0xf]
    %v89 = vld [vmem:[#allocation7 + $0x28] sm:$0xf]
    %v90 = vld [vmem:[#allocation7 + $0x2c] sm:$0xf]
    %v91 = vld [vmem:[#allocation7 + $0x30] sm:$0xf]
    %v92 = vld [vmem:[#allocation7 + $0x34] sm:$0xf]
    %v93 = vld [vmem:[#allocation7 + $0x38] sm:$0xf]
    %v94 = vld [vmem:[#allocation7 + $0x3c] sm:$0xf]
    %v95 = vld [vmem:[%s2] sm:$0x1]
    %v96 = vld [vmem:[%s4] sm:$0x1]
    %v97 = vld [vmem:[#allocation2] sm:$0xff]
    %v98 = vld [vmem:[#allocation2 + $0x8] sm:$0xff]
    %v99 = vpack.c.bf16 %v98, %v97
    %v101 = vlaneseq
    %v102 = vshrl.u32 %v101, 7
    %v103 = vsub.s32 0, %v102
    %v104 = vrot.slane %v95, %v103
    %v122 = vunpack.c.l.b16 %v63
    %v123 = vunpack.c.l.b16 %v64
    %v124 = vunpack.c.l.b16 %v65
    %v125 = vunpack.c.l.b16 %v66
    %v126 = vunpack.c.l.b16 %v67
    %v127 = vunpack.c.l.b16 %v68
    %v128 = vunpack.c.l.b16 %v69
    %v129 = vunpack.c.l.b16 %v70
    %v130 = vunpack.c.l.b16 %v71
    %v131 = vunpack.c.l.b16 %v72
    %v132 = vunpack.c.l.b16 %v73
    %v133 = vunpack.c.l.b16 %v74
    %v134 = vunpack.c.l.b16 %v75
    %v135 = vunpack.c.l.b16 %v76
    %v136 = vunpack.c.l.b16 %v77
    %v137 = vunpack.c.l.b16 %v78
    %v138 = vpack.c.b16 %v123, %v122
    %v139 = vpack.c.b16 %v125, %v124
    %v140 = vpack.c.b16 %v127, %v126
    %v141 = vpack.c.b16 %v129, %v128
    %v142 = vpack.c.b16 %v131, %v130
    %v143 = vpack.c.b16 %v133, %v132
    %v144 = vpack.c.b16 %v135, %v134
    %v145 = vpack.c.b16 %v137, %v136
    %154 = vmatprep.subr.bf16.mxu0 0
    %155 = vmatpush1.bf16.msra.mxu0 %v138
    %156 = vmatprep.subr.bf16.mxu0 0
    %157 = vmatpush1.bf16.msra.mxu0 %v139
    %158 = vmatprep.subr.bf16.mxu0 0
    %159 = vmatpush1.bf16.msra.mxu0 %v140
    %160 = vmatprep.subr.bf16.mxu0 0
    %161 = vmatpush1.bf16.msra.mxu0 %v141
    %162 = vmatprep.subr.bf16.mxu0 0
    %163 = vmatpush1.bf16.msra.mxu0 %v142
    %164 = vmatprep.subr.bf16.mxu0 0
    %165 = vmatpush1.bf16.msra.mxu0 %v143
    %166 = vmatprep.subr.bf16.mxu0 0
    %167 = vmatpush1.bf16.msra.mxu0 %v144
    %168 = vmatprep.subr.bf16.mxu0 0
    %169 = vmatpush1.bf16.msra.mxu0 %v145
    %170 = vmatprep.subr.bf16.mxu0 0
    %171 = vmatpush1.bf16.msra.mxu0 0
    %172 = vmatprep.subr.bf16.mxu0 0
    %173 = vmatpush1.bf16.msra.mxu0 0
    %174 = vmatprep.subr.bf16.mxu0 0
    %175 = vmatpush1.bf16.msra.mxu0 0
    %176 = vmatprep.subr.bf16.mxu0 0
    %177 = vmatpush1.bf16.msra.mxu0 0
    %178 = vmatprep.subr.bf16.mxu0 0
    %179 = vmatpush1.bf16.msra.mxu0 0
    %180 = vmatprep.subr.bf16.mxu0 0
    %181 = vmatpush1.bf16.msra.mxu0 0
    %182 = vmatprep.subr.bf16.mxu0 0
    %183 = vmatpush1.bf16.msra.mxu0 0
    %184 = vmatprep.subr.bf16.mxu0 0
    %185 = vmatpush1.bf16.msra.mxu0 0
    %186 = vmatprep.mubr.bf16.mxu0 0
    %187 = vmatmul.mubr.bf16.gmra.mrb[0].mxu0 %v99
    %v188 = vpop.f32.mrb[0].mxu0
    %v189 = vadd.f32 %v104, %v188
    %v190 = vpop.f32.mrb[0].mxu0
    %v191 = vpop.f32.mrb[0].mxu0
    %v192 = vadd.f32 %v104, %v191
    %v193 = vpop.f32.mrb[0].mxu0
    %194 = vdwg.mxu0
    %v195 = vpack.c.bf16 %v192, %v189
    %v196 = vtanh.bf16.pop %v195
    %v198 = vlaneseq
    %v199 = vshrl.u32 %v198, 7
    %v200 = vsub.s32 0, %v199
    %v201 = vrot.slane %v96, %v200
    %v219 = vunpack.c.l.b16 %v79
    %v220 = vunpack.c.l.b16 %v80
    %v221 = vunpack.c.l.b16 %v81
    %v222 = vunpack.c.l.b16 %v82
    %v223 = vunpack.c.l.b16 %v83
    %v224 = vunpack.c.l.b16 %v84
    %v225 = vunpack.c.l.b16 %v85
    %v226 = vunpack.c.l.b16 %v86
    %v227 = vunpack.c.l.b16 %v87
    %v228 = vunpack.c.l.b16 %v88
    %v229 = vunpack.c.l.b16 %v89
    %v230 = vunpack.c.l.b16 %v90
    %v231 = vunpack.c.l.b16 %v91
    %v232 = vunpack.c.l.b16 %v92
    %v233 = vunpack.c.l.b16 %v93
    %v234 = vunpack.c.l.b16 %v94
    %v235 = vpack.c.b16 %v220, %v219
    %v236 = vpack.c.b16 %v222, %v221
    %v237 = vpack.c.b16 %v224, %v223
    %v238 = vpack.c.b16 %v226, %v225
    %v239 = vpack.c.b16 %v228, %v227
    %v240 = vpack.c.b16 %v230, %v229
    %v241 = vpack.c.b16 %v232, %v231
    %v242 = vpack.c.b16 %v234, %v233
    %251 = vmatprep.subr.bf16.mxu0 0
    %252 = vmatpush1.bf16.msra.mxu0 %v235
    %253 = vmatprep.subr.bf16.mxu0 0
    %254 = vmatpush1.bf16.msra.mxu0 %v236
    %255 = vmatprep.subr.bf16.mxu0 0
    %256 = vmatpush1.bf16.msra.mxu0 %v237
    %257 = vmatprep.subr.bf16.mxu0 0
    %258 = vmatpush1.bf16.msra.mxu0 %v238
    %259 = vmatprep.subr.bf16.mxu0 0
    %260 = vmatpush1.bf16.msra.mxu0 %v239
    %261 = vmatprep.subr.bf16.mxu0 0
    %262 = vmatpush1.bf16.msra.mxu0 %v240
    %263 = vmatprep.subr.bf16.mxu0 0
    %264 = vmatpush1.bf16.msra.mxu0 %v241
    %265 = vmatprep.subr.bf16.mxu0 0
    %266 = vmatpush1.bf16.msra.mxu0 %v242
    %267 = vmatprep.subr.bf16.mxu0 0
    %268 = vmatpush1.bf16.msra.mxu0 0
    %269 = vmatprep.subr.bf16.mxu0 0
    %270 = vmatpush1.bf16.msra.mxu0 0
    %271 = vmatprep.subr.bf16.mxu0 0
    %272 = vmatpush1.bf16.msra.mxu0 0
    %273 = vmatprep.subr.bf16.mxu0 0
    %274 = vmatpush1.bf16.msra.mxu0 0
    %275 = vmatprep.subr.bf16.mxu0 0
    %276 = vmatpush1.bf16.msra.mxu0 0
    %277 = vmatprep.subr.bf16.mxu0 0
    %278 = vmatpush1.bf16.msra.mxu0 0
    %279 = vmatprep.subr.bf16.mxu0 0
    %280 = vmatpush1.bf16.msra.mxu0 0
    %281 = vmatprep.subr.bf16.mxu0 0
    %282 = vmatpush1.bf16.msra.mxu0 0
    %283 = vmatprep.mubr.bf16.mxu0 0
    %284 = vmatmul.mubr.bf16.gmra.mrb[0].mxu0 %v196
    %v285 = vpop.f32.mrb[0].mxu0
    %v286 = vadd.f32 %v201, %v285
    %v287 = vpop.f32.mrb[0].mxu0
    %v288 = vpop.f32.mrb[0].mxu0
    %v289 = vadd.f32 %v201, %v288
    %v290 = vpop.f32.mrb[0].mxu0
    %291 = vdwg.mxu0
    %v292 = vmul.f32 %v286, 0.03125
    %v293 = vmul.f32 %v289, 0.03125
    %v294 = vadd.f32 %v97, %v292
    %v295 = vadd.f32 %v98, %v293
    %v296 = vpack.c.bf16 %v295, %v294
    %297 = vmatprep.subr.bf16.mxu0 0
    %298 = vmatpush1.bf16.msra.mxu0 %v138
    %299 = vmatprep.subr.bf16.mxu0 0
    %300 = vmatpush1.bf16.msra.mxu0 %v139
    %301 = vmatprep.subr.bf16.mxu0 0
    %302 = vmatpush1.bf16.msra.mxu0 %v140
    %303 = vmatprep.subr.bf16.mxu0 0
    %304 = vmatpush1.bf16.msra.mxu0 %v141
    %305 = vmatprep.subr.bf16.mxu0 0
    %306 = vmatpush1.bf16.msra.mxu0 %v142
    %307 = vmatprep.subr.bf16.mxu0 0
    %308 = vmatpush1.bf16.msra.mxu0 %v143
    %309 = vmatprep.subr.bf16.mxu0 0
    %310 = vmatpush1.bf16.msra.mxu0 %v144
    %311 = vmatprep.subr.bf16.mxu0 0
    %312 = vmatpush1.bf16.msra.mxu0 %v145
    %313 = vmatprep.subr.bf16.mxu0 0
    %314 = vmatpush1.bf16.msra.mxu0 0
    %315 = vmatprep.subr.bf16.mxu0 0
    %316 = vmatpush1.bf16.msra.mxu0 0
    %317 = vmatprep.subr.bf16.mxu0 0
    %318 = vmatpush1.bf16.msra.mxu0 0
    %319 = vmatprep.subr.bf16.mxu0 0
    %320 = vmatpush1.bf16.msra.mxu0 0
    %321 = vmatprep.subr.bf16.mxu0 0
    %322 = vmatpush1.bf16.msra.mxu0 0
    %323 = vmatprep.subr.bf16.mxu0 0
    %324 = vmatpush1.bf16.msra.mxu0 0
    %325 = vmatprep.subr.bf16.mxu0 0
    %326 = vmatpush1.bf16.msra.mxu0 0
    %327 = vmatprep.subr.bf16.mxu0 0
    %328 = vmatpush1.bf16.msra.mxu0 0
    %329 = vmatprep.mubr.bf16.mxu0 0
    %330 = vmatmul.mubr.bf16.gmra.mrb[0].mxu0 %v296
    %v331 = vpop.f32.mrb[0].mxu0
    %v332 = vadd.f32 %v104, %v331
    %v333 = vpop.f32.mrb[0].mxu0
    %v334 = vpop.f32.mrb[0].mxu0
    %v335 = vadd.f32 %v104, %v334
    %v336 = vpop.f32.mrb[0].mxu0
    %337 = vdwg.mxu0
    %v338 = vpack.c.bf16 %v335, %v332
    %v339 = vtanh.bf16.pop %v338
    %340 = vmatprep.subr.bf16.mxu0 0
    %341 = vmatpush1.bf16.msra.mxu0 %v235
    %342 = vmatprep.subr.bf16.mxu0 0
    %343 = vmatpush1.bf16.msra.mxu0 %v236
    %344 = vmatprep.subr.bf16.mxu0 0
    %345 = vmatpush1.bf16.msra.mxu0 %v237
    %346 = vmatprep.subr.bf16.mxu0 0
    %347 = vmatpush1.bf16.msra.mxu0 %v238
    %348 = vmatprep.subr.bf16.mxu0 0
    %349 = vmatpush1.bf16.msra.mxu0 %v239
    %350 = vmatprep.subr.bf16.mxu0 0
    %351 = vmatpush1.bf16.msra.mxu0 %v240
    %352 = vmatprep.subr.bf16.mxu0 0
    %353 = vmatpush1.bf16.msra.mxu0 %v241
    %354 = vmatprep.subr.bf16.mxu0 0
    %355 = vmatpush1.bf16.msra.mxu0 %v242
    %356 = vmatprep.subr.bf16.mxu0 0
    %357 = vmatpush1.bf16.msra.mxu0 0
    %358 = vmatprep.subr.bf16.mxu0 0
    %359 = vmatpush1.bf16.msra.mxu0 0
    %360 = vmatprep.subr.bf16.mxu0 0
    %361 = vmatpush1.bf16.msra.mxu0 0
    %362 = vmatprep.subr.bf16.mxu0 0
    %363 = vmatpush1.bf16.msra.mxu0 0
    %364 = vmatprep.subr.bf16.mxu0 0
    %365 = vmatpush1.bf16.msra.mxu0 0
    %366 = vmatprep.subr.bf16.mxu0 0
    %367 = vmatpush1.bf16.msra.mxu0 0
    %368 = vmatprep.subr.bf16.mxu0 0
    %369 = vmatpush1.bf16.msra.mxu0 0
    %370 = vmatprep.subr.bf16.mxu0 0
    %371 = vmatpush1.bf16.msra.mxu0 0
    %372 = vmatprep.mubr.bf16.mxu0 0
    %373 = vmatmul.mubr.bf16.gmra.mrb[0].mxu0 %v339
    %v374 = vpop.f32.mrb[0].mxu0
    %v375 = vadd.f32 %v201, %v374
    %v376 = vpop.f32.mrb[0].mxu0
    %v377 = vpop.f32.mrb[0].mxu0
    %v378 = vadd.f32 %v201, %v377
    %v379 = vpop.f32.mrb[0].mxu0
    %380 = vdwg.mxu0
    %v381 = vmul.f32 %v375, 2.0
    %v382 = vmul.f32 %v378, 2.0
    %v383 = vsub.f32 %v381, %v286
    %v384 = vsub.f32 %v382, %v289
    %v385 = vmul.f32 %v383, 0.03125
    %v386 = vmul.f32 %v384, 0.03125
    %v387 = vadd.f32 %v294, %v385
    %v388 = vadd.f32 %v295, %v386
    %v389 = vadd.f32 %v387, %v385
    %v390 = vadd.f32 %v388, %v386
    %v391 = vpack.c.bf16 %v390, %v389
    %392 = vmatprep.subr.bf16.mxu0 0
    %393 = vmatpush1.bf16.msra.mxu0 %v138
    %394 = vmatprep.subr.bf16.mxu0 0
    %395 = vmatpush1.bf16.msra.mxu0 %v139
    %396 = vmatprep.subr.bf16.mxu0 0
    %397 = vmatpush1.bf16.msra.mxu0 %v140
    %398 = vmatprep.subr.bf16.mxu0 0
    %399 = vmatpush1.bf16.msra.mxu0 %v141
    %400 = vmatprep.subr.bf16.mxu0 0
    %401 = vmatpush1.bf16.msra.mxu0 %v142
    %402 = vmatprep.subr.bf16.mxu0 0
    %403 = vmatpush1.bf16.msra.mxu0 %v143
    %404 = vmatprep.subr.bf16.mxu0 0
    %405 = vmatpush1.bf16.msra.mxu0 %v144
    %406 = vmatprep.subr.bf16.mxu0 0
    %407 = vmatpush1.bf16.msra.mxu0 %v145
    %408 = vmatprep.subr.bf16.mxu0 0
    %409 = vmatpush1.bf16.msra.mxu0 0
    %410 = vmatprep.subr.bf16.mxu0 0
    %411 = vmatpush1.bf16.msra.mxu0 0
    %412 = vmatprep.subr.bf16.mxu0 0
    %413 = vmatpush1.bf16.msra.mxu0 0
    %414 = vmatprep.subr.bf16.mxu0 0
    %415 = vmatpush1.bf16.msra.mxu0 0
    %416 = vmatprep.subr.bf16.mxu0 0
    %417 = vmatpush1.bf16.msra.mxu0 0
    %418 = vmatprep.subr.bf16.mxu0 0
    %419 = vmatpush1.bf16.msra.mxu0 0
    %420 = vmatprep.subr.bf16.mxu0 0
    %421 = vmatpush1.bf16.msra.mxu0 0
    %422 = vmatprep.subr.bf16.mxu0 0
    %423 = vmatpush1.bf16.msra.mxu0 0
    %424 = vmatprep.mubr.bf16.mxu0 0
    %425 = vmatmul.mubr.bf16.gmra.mrb[0].mxu0 %v391
    %v426 = vpop.f32.mrb[0].mxu0
    %v427 = vadd.f32 %v104, %v426
    %v428 = vpop.f32.mrb[0].mxu0
    %v429 = vpop.f32.mrb[0].mxu0
    %v430 = vadd.f32 %v104, %v429
    %v431 = vpop.f32.mrb[0].mxu0
    %432 = vdwg.mxu0
    %v433 = vpack.c.bf16 %v430, %v427
    %v434 = vtanh.bf16.pop %v433
    %435 = vmatprep.subr.bf16.mxu0 0
    %436 = vmatpush1.bf16.msra.mxu0 %v235
    %437 = vmatprep.subr.bf16.mxu0 0
    %438 = vmatpush1.bf16.msra.mxu0 %v236
    %439 = vmatprep.subr.bf16.mxu0 0
    %440 = vmatpush1.bf16.msra.mxu0 %v237
    %441 = vmatprep.subr.bf16.mxu0 0
    %442 = vmatpush1.bf16.msra.mxu0 %v238
    %443 = vmatprep.subr.bf16.mxu0 0
    %444 = vmatpush1.bf16.msra.mxu0 %v239
    %445 = vmatprep.subr.bf16.mxu0 0
    %446 = vmatpush1.bf16.msra.mxu0 %v240
    %447 = vmatprep.subr.bf16.mxu0 0
    %448 = vmatpush1.bf16.msra.mxu0 %v241
    %449 = vmatprep.subr.bf16.mxu0 0
    %450 = vmatpush1.bf16.msra.mxu0 %v242
    %451 = vmatprep.subr.bf16.mxu0 0
    %452 = vmatpush1.bf16.msra.mxu0 0
    %453 = vmatprep.subr.bf16.mxu0 0
    %454 = vmatpush1.bf16.msra.mxu0 0
    %455 = vmatprep.subr.bf16.mxu0 0
    %456 = vmatpush1.bf16.msra.mxu0 0
    %457 = vmatprep.subr.bf16.mxu0 0
    %458 = vmatpush1.bf16.msra.mxu0 0
    %459 = vmatprep.subr.bf16.mxu0 0
    %460 = vmatpush1.bf16.msra.mxu0 0
    %461 = vmatprep.subr.bf16.mxu0 0
    %462 = vmatpush1.bf16.msra.mxu0 0
    %463 = vmatprep.subr.bf16.mxu0 0
    %464 = vmatpush1.bf16.msra.mxu0 0
    %465 = vmatprep.subr.bf16.mxu0 0
    %466 = vmatpush1.bf16.msra.mxu0 0
    %467 = vmatprep.mubr.bf16.mxu0 0
    %468 = vmatmul.mubr.bf16.gmra.mrb[0].mxu0 %v434
    %v469 = vpop.f32.mrb[0].mxu0
    %v470 = vadd.f32 %v201, %v469
    %v471 = vpop.f32.mrb[0].mxu0
    %v472 = vpop.f32.mrb[0].mxu0
    %v473 = vadd.f32 %v201, %v472
    %v474 = vpop.f32.mrb[0].mxu0
    %475 = vdwg.mxu0
    %v476 = vmul.f32 %v470, 2.0
    %v477 = vmul.f32 %v473, 2.0
    %v478 = vsub.f32 %v476, %v383
    %v479 = vsub.f32 %v477, %v384
    %v480 = vmul.f32 %v478, 0.03125
    %v481 = vmul.f32 %v479, 0.03125
    %v482 = vadd.f32 %v389, %v480
    %v483 = vadd.f32 %v390, %v481
    %v484 = vadd.f32 %v482, %v480
    %v485 = vadd.f32 %v483, %v481
    %v486 = vpack.c.bf16 %v485, %v484
    %487 = vmatprep.subr.bf16.mxu0 0
    %488 = vmatpush1.bf16.msra.mxu0 %v138
    %489 = vmatprep.subr.bf16.mxu0 0
    %490 = vmatpush1.bf16.msra.mxu0 %v139
    %491 = vmatprep.subr.bf16.mxu0 0
    %492 = vmatpush1.bf16.msra.mxu0 %v140
    %493 = vmatprep.subr.bf16.mxu0 0
    %494 = vmatpush1.bf16.msra.mxu0 %v141
    %495 = vmatprep.subr.bf16.mxu0 0
    %496 = vmatpush1.bf16.msra.mxu0 %v142
    %497 = vmatprep.subr.bf16.mxu0 0
    %498 = vmatpush1.bf16.msra.mxu0 %v143
    %499 = vmatprep.subr.bf16.mxu0 0
    %500 = vmatpush1.bf16.msra.mxu0 %v144
    %501 = vmatprep.subr.bf16.mxu0 0
    %502 = vmatpush1.bf16.msra.mxu0 %v145
    %503 = vmatprep.subr.bf16.mxu0 0
    %504 = vmatpush1.bf16.msra.mxu0 0
    %505 = vmatprep.subr.bf16.mxu0 0
    %506 = vmatpush1.bf16.msra.mxu0 0
    %507 = vmatprep.subr.bf16.mxu0 0
    %508 = vmatpush1.bf16.msra.mxu0 0
    %509 = vmatprep.subr.bf16.mxu0 0
    %510 = vmatpush1.bf16.msra.mxu0 0
    %511 = vmatprep.subr.bf16.mxu0 0
    %512 = vmatpush1.bf16.msra.mxu0 0
    %513 = vmatprep.subr.bf16.mxu0 0
    %514 = vmatpush1.bf16.msra.mxu0 0
    %515 = vmatprep.subr.bf16.mxu0 0
    %516 = vmatpush1.bf16.msra.mxu0 0
    %517 = vmatprep.subr.bf16.mxu0 0
    %518 = vmatpush1.bf16.msra.mxu0 0
    %519 = vmatprep.mubr.bf16.mxu0 0
    %520 = vmatmul.mubr.bf16.gmra.mrb[0].mxu0 %v486
    %v521 = vpop.f32.mrb[0].mxu0
    %v522 = vadd.f32 %v104, %v521
    %v523 = vpop.f32.mrb[0].mxu0
    %v524 = vpop.f32.mrb[0].mxu0
    %v525 = vadd.f32 %v104, %v524
    %v526 = vpop.f32.mrb[0].mxu0
    %527 = vdwg.mxu0
    %v528 = vpack.c.bf16 %v525, %v522
    %v529 = vtanh.bf16.pop %v528
    %530 = vmatprep.subr.bf16.mxu0 0
    %531 = vmatpush1.bf16.msra.mxu0 %v235
    %532 = vmatprep.subr.bf16.mxu0 0
    %533 = vmatpush1.bf16.msra.mxu0 %v236
    %534 = vmatprep.subr.bf16.mxu0 0
    %535 = vmatpush1.bf16.msra.mxu0 %v237
    %536 = vmatprep.subr.bf16.mxu0 0
    %537 = vmatpush1.bf16.msra.mxu0 %v238
    %538 = vmatprep.subr.bf16.mxu0 0
    %539 = vmatpush1.bf16.msra.mxu0 %v239
    %540 = vmatprep.subr.bf16.mxu0 0
    %541 = vmatpush1.bf16.msra.mxu0 %v240
    %542 = vmatprep.subr.bf16.mxu0 0
    %543 = vmatpush1.bf16.msra.mxu0 %v241
    %544 = vmatprep.subr.bf16.mxu0 0
    %545 = vmatpush1.bf16.msra.mxu0 %v242
    %546 = vmatprep.subr.bf16.mxu0 0
    %547 = vmatpush1.bf16.msra.mxu0 0
    %548 = vmatprep.subr.bf16.mxu0 0
    %549 = vmatpush1.bf16.msra.mxu0 0
    %550 = vmatprep.subr.bf16.mxu0 0
    %551 = vmatpush1.bf16.msra.mxu0 0
    %552 = vmatprep.subr.bf16.mxu0 0
    %553 = vmatpush1.bf16.msra.mxu0 0
    %554 = vmatprep.subr.bf16.mxu0 0
    %555 = vmatpush1.bf16.msra.mxu0 0
    %556 = vmatprep.subr.bf16.mxu0 0
    %557 = vmatpush1.bf16.msra.mxu0 0
    %558 = vmatprep.subr.bf16.mxu0 0
    %559 = vmatpush1.bf16.msra.mxu0 0
    %560 = vmatprep.subr.bf16.mxu0 0
    %561 = vmatpush1.bf16.msra.mxu0 0
    %562 = vmatprep.mubr.bf16.mxu0 0
    %563 = vmatmul.mubr.bf16.gmra.mrb[0].mxu0 %v529
    %v564 = vpop.f32.mrb[0].mxu0
    %v565 = vadd.f32 %v201, %v564
    %v566 = vpop.f32.mrb[0].mxu0
    %v567 = vpop.f32.mrb[0].mxu0
    %v568 = vadd.f32 %v201, %v567
    %v569 = vpop.f32.mrb[0].mxu0
    %570 = vdwg.mxu0
    %v571 = vmul.f32 %v565, 2.0
    %v572 = vmul.f32 %v568, 2.0
    %v573 = vsub.f32 %v571, %v478
    %v574 = vsub.f32 %v572, %v479
    %v575 = vmul.f32 %v573, 0.03125
    %v576 = vmul.f32 %v574, 0.03125
    %v577 = vadd.f32 %v484, %v575
    %v578 = vadd.f32 %v485, %v576
    %v579 = vadd.f32 %v577, %v575
    %v580 = vadd.f32 %v578, %v576
    %v581 = vpack.c.bf16 %v580, %v579
    %582 = vmatprep.subr.bf16.mxu0 0
    %583 = vmatpush1.bf16.msra.mxu0 %v138
    %584 = vmatprep.subr.bf16.mxu0 0
    %585 = vmatpush1.bf16.msra.mxu0 %v139
    %586 = vmatprep.subr.bf16.mxu0 0
    %587 = vmatpush1.bf16.msra.mxu0 %v140
    %588 = vmatprep.subr.bf16.mxu0 0
    %589 = vmatpush1.bf16.msra.mxu0 %v141
    %590 = vmatprep.subr.bf16.mxu0 0
    %591 = vmatpush1.bf16.msra.mxu0 %v142
    %592 = vmatprep.subr.bf16.mxu0 0
    %593 = vmatpush1.bf16.msra.mxu0 %v143
    %594 = vmatprep.subr.bf16.mxu0 0
    %595 = vmatpush1.bf16.msra.mxu0 %v144
    %596 = vmatprep.subr.bf16.mxu0 0
    %597 = vmatpush1.bf16.msra.mxu0 %v145
    %598 = vmatprep.subr.bf16.mxu0 0
    %599 = vmatpush1.bf16.msra.mxu0 0
    %600 = vmatprep.subr.bf16.mxu0 0
    %601 = vmatpush1.bf16.msra.mxu0 0
    %602 = vmatprep.subr.bf16.mxu0 0
    %603 = vmatpush1.bf16.msra.mxu0 0
    %604 = vmatprep.subr.bf16.mxu0 0
    %605 = vmatpush1.bf16.msra.mxu0 0
    %606 = vmatprep.subr.bf16.mxu0 0
    %607 = vmatpush1.bf16.msra.mxu0 0
    %608 = vmatprep.subr.bf16.mxu0 0
    %609 = vmatpush1.bf16.msra.mxu0 0
    %610 = vmatprep.subr.bf16.mxu0 0
    %611 = vmatpush1.bf16.msra.mxu0 0
    %612 = vmatprep.subr.bf16.mxu0 0
    %613 = vmatpush1.bf16.msra.mxu0 0
    %614 = vmatprep.mubr.bf16.mxu0 0
    %615 = vmatmul.mubr.bf16.gmra.mrb[0].mxu0 %v581
    %v616 = vpop.f32.mrb[0].mxu0
    %v617 = vadd.f32 %v104, %v616
    %v618 = vpop.f32.mrb[0].mxu0
    %v619 = vpop.f32.mrb[0].mxu0
    %v620 = vadd.f32 %v104, %v619
    %v621 = vpop.f32.mrb[0].mxu0
    %622 = vdwg.mxu0
    %v623 = vpack.c.bf16 %v620, %v617
    %v624 = vtanh.bf16.pop %v623
    %625 = vmatprep.subr.bf16.mxu0 0
    %626 = vmatpush1.bf16.msra.mxu0 %v235
    %627 = vmatprep.subr.bf16.mxu0 0
    %628 = vmatpush1.bf16.msra.mxu0 %v236
    %629 = vmatprep.subr.bf16.mxu0 0
    %630 = vmatpush1.bf16.msra.mxu0 %v237
    %631 = vmatprep.subr.bf16.mxu0 0
    %632 = vmatpush1.bf16.msra.mxu0 %v238
    %633 = vmatprep.subr.bf16.mxu0 0
    %634 = vmatpush1.bf16.msra.mxu0 %v239
    %635 = vmatprep.subr.bf16.mxu0 0
    %636 = vmatpush1.bf16.msra.mxu0 %v240
    %637 = vmatprep.subr.bf16.mxu0 0
    %638 = vmatpush1.bf16.msra.mxu0 %v241
    %639 = vmatprep.subr.bf16.mxu0 0
    %640 = vmatpush1.bf16.msra.mxu0 %v242
    %641 = vmatprep.subr.bf16.mxu0 0
    %642 = vmatpush1.bf16.msra.mxu0 0
    %643 = vmatprep.subr.bf16.mxu0 0
    %644 = vmatpush1.bf16.msra.mxu0 0
    %645 = vmatprep.subr.bf16.mxu0 0
    %646 = vmatpush1.bf16.msra.mxu0 0
    %647 = vmatprep.subr.bf16.mxu0 0
    %648 = vmatpush1.bf16.msra.mxu0 0
    %649 = vmatprep.subr.bf16.mxu0 0
    %650 = vmatpush1.bf16.msra.mxu0 0
    %651 = vmatprep.subr.bf16.mxu0 0
    %652 = vmatpush1.bf16.msra.mxu0 0
    %653 = vmatprep.subr.bf16.mxu0 0
    %654 = vmatpush1.bf16.msra.mxu0 0
    %655 = vmatprep.subr.bf16.mxu0 0
    %656 = vmatpush1.bf16.msra.mxu0 0
    %657 = vmatprep.mubr.bf16.mxu0 0
    %658 = vmatmul.mubr.bf16.gmra.mrb[0].mxu0 %v624
    %v659 = vpop.f32.mrb[0].mxu0
    %v660 = vadd.f32 %v201, %v659
    %v661 = vpop.f32.mrb[0].mxu0
    %v662 = vpop.f32.mrb[0].mxu0
    %v663 = vadd.f32 %v201, %v662
    %v664 = vpop.f32.mrb[0].mxu0
    %665 = vdwg.mxu0
    %v666 = vmul.f32 %v660, 2.0
    %v667 = vmul.f32 %v663, 2.0
    %v668 = vsub.f32 %v666, %v573
    %v669 = vsub.f32 %v667, %v574
    %v670 = vmul.f32 %v668, 0.03125
    %v671 = vmul.f32 %v669, 0.03125
    %v672 = vadd.f32 %v579, %v670
    %v673 = vadd.f32 %v580, %v671
    %v674 = vadd.f32 %v672, %v670
    %v675 = vadd.f32 %v673, %v671
    %v676 = vpack.c.bf16 %v675, %v674
    %677 = vmatprep.subr.bf16.mxu0 0
    %678 = vmatpush1.bf16.msra.mxu0 %v138
    %679 = vmatprep.subr.bf16.mxu0 0
    %680 = vmatpush1.bf16.msra.mxu0 %v139
    %681 = vmatprep.subr.bf16.mxu0 0
    %682 = vmatpush1.bf16.msra.mxu0 %v140
    %683 = vmatprep.subr.bf16.mxu0 0
    %684 = vmatpush1.bf16.msra.mxu0 %v141
    %685 = vmatprep.subr.bf16.mxu0 0
    %686 = vmatpush1.bf16.msra.mxu0 %v142
    %687 = vmatprep.subr.bf16.mxu0 0
    %688 = vmatpush1.bf16.msra.mxu0 %v143
    %689 = vmatprep.subr.bf16.mxu0 0
    %690 = vmatpush1.bf16.msra.mxu0 %v144
    %691 = vmatprep.subr.bf16.mxu0 0
    %692 = vmatpush1.bf16.msra.mxu0 %v145
    %693 = vmatprep.subr.bf16.mxu0 0
    %694 = vmatpush1.bf16.msra.mxu0 0
    %695 = vmatprep.subr.bf16.mxu0 0
    %696 = vmatpush1.bf16.msra.mxu0 0
    %697 = vmatprep.subr.bf16.mxu0 0
    %698 = vmatpush1.bf16.msra.mxu0 0
    %699 = vmatprep.subr.bf16.mxu0 0
    %700 = vmatpush1.bf16.msra.mxu0 0
    %701 = vmatprep.subr.bf16.mxu0 0
    %702 = vmatpush1.bf16.msra.mxu0 0
    %703 = vmatprep.subr.bf16.mxu0 0
    %704 = vmatpush1.bf16.msra.mxu0 0
    %705 = vmatprep.subr.bf16.mxu0 0
    %706 = vmatpush1.bf16.msra.mxu0 0
    %707 = vmatprep.subr.bf16.mxu0 0
    %708 = vmatpush1.bf16.msra.mxu0 0
    %709 = vmatprep.mubr.bf16.mxu0 0
    %710 = vmatmul.mubr.bf16.gmra.mrb[0].mxu0 %v676
    %v711 = vpop.f32.mrb[0].mxu0
    %v712 = vadd.f32 %v104, %v711
    %v713 = vpop.f32.mrb[0].mxu0
    %v714 = vpop.f32.mrb[0].mxu0
    %v715 = vadd.f32 %v104, %v714
    %v716 = vpop.f32.mrb[0].mxu0
    %717 = vdwg.mxu0
    %v718 = vpack.c.bf16 %v715, %v712
    %v719 = vtanh.bf16.pop %v718
    %720 = vmatprep.subr.bf16.mxu0 0
    %721 = vmatpush1.bf16.msra.mxu0 %v235
    %722 = vmatprep.subr.bf16.mxu0 0
    %723 = vmatpush1.bf16.msra.mxu0 %v236
    %724 = vmatprep.subr.bf16.mxu0 0
    %725 = vmatpush1.bf16.msra.mxu0 %v237
    %726 = vmatprep.subr.bf16.mxu0 0
    %727 = vmatpush1.bf16.msra.mxu0 %v238
    %728 = vmatprep.subr.bf16.mxu0 0
    %729 = vmatpush1.bf16.msra.mxu0 %v239
    %730 = vmatprep.subr.bf16.mxu0 0
    %731 = vmatpush1.bf16.msra.mxu0 %v240
    %732 = vmatprep.subr.bf16.mxu0 0
    %733 = vmatpush1.bf16.msra.mxu0 %v241
    %734 = vmatprep.subr.bf16.mxu0 0
    %735 = vmatpush1.bf16.msra.mxu0 %v242
    %736 = vmatprep.subr.bf16.mxu0 0
    %737 = vmatpush1.bf16.msra.mxu0 0
    %738 = vmatprep.subr.bf16.mxu0 0
    %739 = vmatpush1.bf16.msra.mxu0 0
    %740 = vmatprep.subr.bf16.mxu0 0
    %741 = vmatpush1.bf16.msra.mxu0 0
    %742 = vmatprep.subr.bf16.mxu0 0
    %743 = vmatpush1.bf16.msra.mxu0 0
    %744 = vmatprep.subr.bf16.mxu0 0
    %745 = vmatpush1.bf16.msra.mxu0 0
    %746 = vmatprep.subr.bf16.mxu0 0
    %747 = vmatpush1.bf16.msra.mxu0 0
    %748 = vmatprep.subr.bf16.mxu0 0
    %749 = vmatpush1.bf16.msra.mxu0 0
    %750 = vmatprep.subr.bf16.mxu0 0
    %751 = vmatpush1.bf16.msra.mxu0 0
    %752 = vmatprep.mubr.bf16.mxu0 0
    %753 = vmatmul.mubr.bf16.gmra.mrb[0].mxu0 %v719
    %v754 = vpop.f32.mrb[0].mxu0
    %v755 = vadd.f32 %v201, %v754
    %v756 = vpop.f32.mrb[0].mxu0
    %v757 = vpop.f32.mrb[0].mxu0
    %v758 = vadd.f32 %v201, %v757
    %v759 = vpop.f32.mrb[0].mxu0
    %760 = vdwg.mxu0
    %v761 = vmul.f32 %v755, 2.0
    %v762 = vmul.f32 %v758, 2.0
    %v763 = vsub.f32 %v761, %v668
    %v764 = vsub.f32 %v762, %v669
    %v765 = vmul.f32 %v763, 0.03125
    %v766 = vmul.f32 %v764, 0.03125
    %v767 = vadd.f32 %v674, %v765
    %v768 = vadd.f32 %v675, %v766
    %v769 = vadd.f32 %v767, %v765
    %v770 = vadd.f32 %v768, %v766
    %v771 = vpack.c.bf16 %v770, %v769
    %772 = vmatprep.subr.bf16.mxu0 0
    %773 = vmatpush1.bf16.msra.mxu0 %v138
    %774 = vmatprep.subr.bf16.mxu0 0
    %775 = vmatpush1.bf16.msra.mxu0 %v139
    %776 = vmatprep.subr.bf16.mxu0 0
    %777 = vmatpush1.bf16.msra.mxu0 %v140
    %778 = vmatprep.subr.bf16.mxu0 0
    %779 = vmatpush1.bf16.msra.mxu0 %v141
    %780 = vmatprep.subr.bf16.mxu0 0
    %781 = vmatpush1.bf16.msra.mxu0 %v142
    %782 = vmatprep.subr.bf16.mxu0 0
    %783 = vmatpush1.bf16.msra.mxu0 %v143
    %784 = vmatprep.subr.bf16.mxu0 0
    %785 = vmatpush1.bf16.msra.mxu0 %v144
    %786 = vmatprep.subr.bf16.mxu0 0
    %787 = vmatpush1.bf16.msra.mxu0 %v145
    %788 = vmatprep.subr.bf16.mxu0 0
    %789 = vmatpush1.bf16.msra.mxu0 0
    %790 = vmatprep.subr.bf16.mxu0 0
    %791 = vmatpush1.bf16.msra.mxu0 0
    %792 = vmatprep.subr.bf16.mxu0 0
    %793 = vmatpush1.bf16.msra.mxu0 0
    %794 = vmatprep.subr.bf16.mxu0 0
    %795 = vmatpush1.bf16.msra.mxu0 0
    %796 = vmatprep.subr.bf16.mxu0 0
    %797 = vmatpush1.bf16.msra.mxu0 0
    %798 = vmatprep.subr.bf16.mxu0 0
    %799 = vmatpush1.bf16.msra.mxu0 0
    %800 = vmatprep.subr.bf16.mxu0 0
    %801 = vmatpush1.bf16.msra.mxu0 0
    %802 = vmatprep.subr.bf16.mxu0 0
    %803 = vmatpush1.bf16.msra.mxu0 0
    %804 = vmatprep.mubr.bf16.mxu0 0
    %805 = vmatmul.mubr.bf16.gmra.mrb[0].mxu0 %v771
    %v806 = vpop.f32.mrb[0].mxu0
    %v807 = vadd.f32 %v104, %v806
    %v808 = vpop.f32.mrb[0].mxu0
    %v809 = vpop.f32.mrb[0].mxu0
    %v810 = vadd.f32 %v104, %v809
    %v811 = vpop.f32.mrb[0].mxu0
    %812 = vdwg.mxu0
    %v813 = vpack.c.bf16 %v810, %v807
    %v814 = vtanh.bf16.pop %v813
    %815 = vmatprep.subr.bf16.mxu0 0
    %816 = vmatpush1.bf16.msra.mxu0 %v235
    %817 = vmatprep.subr.bf16.mxu0 0
    %818 = vmatpush1.bf16.msra.mxu0 %v236
    %819 = vmatprep.subr.bf16.mxu0 0
    %820 = vmatpush1.bf16.msra.mxu0 %v237
    %821 = vmatprep.subr.bf16.mxu0 0
    %822 = vmatpush1.bf16.msra.mxu0 %v238
    %823 = vmatprep.subr.bf16.mxu0 0
    %824 = vmatpush1.bf16.msra.mxu0 %v239
    %825 = vmatprep.subr.bf16.mxu0 0
    %826 = vmatpush1.bf16.msra.mxu0 %v240
    %827 = vmatprep.subr.bf16.mxu0 0
    %828 = vmatpush1.bf16.msra.mxu0 %v241
    %829 = vmatprep.subr.bf16.mxu0 0
    %830 = vmatpush1.bf16.msra.mxu0 %v242
    %831 = vmatprep.subr.bf16.mxu0 0
    %832 = vmatpush1.bf16.msra.mxu0 0
    %833 = vmatprep.subr.bf16.mxu0 0
    %834 = vmatpush1.bf16.msra.mxu0 0
    %835 = vmatprep.subr.bf16.mxu0 0
    %836 = vmatpush1.bf16.msra.mxu0 0
    %837 = vmatprep.subr.bf16.mxu0 0
    %838 = vmatpush1.bf16.msra.mxu0 0
    %839 = vmatprep.subr.bf16.mxu0 0
    %840 = vmatpush1.bf16.msra.mxu0 0
    %841 = vmatprep.subr.bf16.mxu0 0
    %842 = vmatpush1.bf16.msra.mxu0 0
    %843 = vmatprep.subr.bf16.mxu0 0
    %844 = vmatpush1.bf16.msra.mxu0 0
    %845 = vmatprep.subr.bf16.mxu0 0
    %846 = vmatpush1.bf16.msra.mxu0 0
    %847 = vmatprep.mubr.bf16.mxu0 0
    %848 = vmatmul.mubr.bf16.gmra.mrb[0].mxu0 %v814
    %v849 = vpop.f32.mrb[0].mxu0
    %v850 = vadd.f32 %v201, %v849
    %v851 = vpop.f32.mrb[0].mxu0
    %v852 = vpop.f32.mrb[0].mxu0
    %v853 = vadd.f32 %v201, %v852
    %v854 = vpop.f32.mrb[0].mxu0
    %855 = vdwg.mxu0
    %v856 = vmul.f32 %v850, 2.0
    %v857 = vmul.f32 %v853, 2.0
    %v858 = vsub.f32 %v856, %v763
    %v859 = vsub.f32 %v857, %v764
    %v860 = vmul.f32 %v858, 0.03125
    %v861 = vmul.f32 %v859, 0.03125
    %v862 = vadd.f32 %v769, %v860
    %v863 = vadd.f32 %v770, %v861
    %v864 = vadd.f32 %v862, %v860
    %v865 = vadd.f32 %v863, %v861
    %v866 = vpack.c.bf16 %v865, %v864
    %867 = vmatprep.subr.bf16.mxu0 0
    %868 = vmatpush1.bf16.msra.mxu0 %v138
    %869 = vmatprep.subr.bf16.mxu0 0
    %870 = vmatpush1.bf16.msra.mxu0 %v139
    %871 = vmatprep.subr.bf16.mxu0 0
    %872 = vmatpush1.bf16.msra.mxu0 %v140
    %873 = vmatprep.subr.bf16.mxu0 0
    %874 = vmatpush1.bf16.msra.mxu0 %v141
    %875 = vmatprep.subr.bf16.mxu0 0
    %876 = vmatpush1.bf16.msra.mxu0 %v142
    %877 = vmatprep.subr.bf16.mxu0 0
    %878 = vmatpush1.bf16.msra.mxu0 %v143
    %879 = vmatprep.subr.bf16.mxu0 0
    %880 = vmatpush1.bf16.msra.mxu0 %v144
    %881 = vmatprep.subr.bf16.mxu0 0
    %882 = vmatpush1.bf16.msra.mxu0 %v145
    %883 = vmatprep.subr.bf16.mxu0 0
    %884 = vmatpush1.bf16.msra.mxu0 0
    %885 = vmatprep.subr.bf16.mxu0 0
    %886 = vmatpush1.bf16.msra.mxu0 0
    %887 = vmatprep.subr.bf16.mxu0 0
    %888 = vmatpush1.bf16.msra.mxu0 0
    %889 = vmatprep.subr.bf16.mxu0 0
    %890 = vmatpush1.bf16.msra.mxu0 0
    %891 = vmatprep.subr.bf16.mxu0 0
    %892 = vmatpush1.bf16.msra.mxu0 0
    %893 = vmatprep.subr.bf16.mxu0 0
    %894 = vmatpush1.bf16.msra.mxu0 0
    %895 = vmatprep.subr.bf16.mxu0 0
    %896 = vmatpush1.bf16.msra.mxu0 0
    %897 = vmatprep.subr.bf16.mxu0 0
    %898 = vmatpush1.bf16.msra.mxu0 0
    %899 = vmatprep.mubr.bf16.mxu0 0
    %900 = vmatmul.mubr.bf16.gmra.mrb[0].mxu0 %v866
    %v901 = vpop.f32.mrb[0].mxu0
    %v902 = vadd.f32 %v104, %v901
    %v903 = vpop.f32.mrb[0].mxu0
    %v904 = vpop.f32.mrb[0].mxu0
    %v905 = vadd.f32 %v104, %v904
    %v906 = vpop.f32.mrb[0].mxu0
    %907 = vdwg.mxu0
    %v908 = vpack.c.bf16 %v905, %v902
    %v909 = vtanh.bf16.pop %v908
    %910 = vmatprep.subr.bf16.mxu0 0
    %911 = vmatpush1.bf16.msra.mxu0 %v235
    %912 = vmatprep.subr.bf16.mxu0 0
    %913 = vmatpush1.bf16.msra.mxu0 %v236
    %914 = vmatprep.subr.bf16.mxu0 0
    %915 = vmatpush1.bf16.msra.mxu0 %v237
    %916 = vmatprep.subr.bf16.mxu0 0
    %917 = vmatpush1.bf16.msra.mxu0 %v238
    %918 = vmatprep.subr.bf16.mxu0 0
    %919 = vmatpush1.bf16.msra.mxu0 %v239
    %920 = vmatprep.subr.bf16.mxu0 0
    %921 = vmatpush1.bf16.msra.mxu0 %v240
    %922 = vmatprep.subr.bf16.mxu0 0
    %923 = vmatpush1.bf16.msra.mxu0 %v241
    %924 = vmatprep.subr.bf16.mxu0 0
    %925 = vmatpush1.bf16.msra.mxu0 %v242
    %926 = vmatprep.subr.bf16.mxu0 0
    %927 = vmatpush1.bf16.msra.mxu0 0
    %928 = vmatprep.subr.bf16.mxu0 0
    %929 = vmatpush1.bf16.msra.mxu0 0
    %930 = vmatprep.subr.bf16.mxu0 0
    %931 = vmatpush1.bf16.msra.mxu0 0
    %932 = vmatprep.subr.bf16.mxu0 0
    %933 = vmatpush1.bf16.msra.mxu0 0
    %934 = vmatprep.subr.bf16.mxu0 0
    %935 = vmatpush1.bf16.msra.mxu0 0
    %936 = vmatprep.subr.bf16.mxu0 0
    %937 = vmatpush1.bf16.msra.mxu0 0
    %938 = vmatprep.subr.bf16.mxu0 0
    %939 = vmatpush1.bf16.msra.mxu0 0
    %940 = vmatprep.subr.bf16.mxu0 0
    %941 = vmatpush1.bf16.msra.mxu0 0
    %942 = vmatprep.mubr.bf16.mxu0 0
    %943 = vmatmul.mubr.bf16.gmra.mrb[0].mxu0 %v909
    %v944 = vpop.f32.mrb[0].mxu0
    %v945 = vadd.f32 %v201, %v944
    %v946 = vpop.f32.mrb[0].mxu0
    %v947 = vpop.f32.mrb[0].mxu0
    %v948 = vadd.f32 %v201, %v947
    %v949 = vpop.f32.mrb[0].mxu0
    %950 = vdwg.mxu0
    %v951 = vmul.f32 %v945, 2.0
    %v952 = vmul.f32 %v948, 2.0
    %v953 = vsub.f32 %v951, %v858
    %v954 = vsub.f32 %v952, %v859
    %v955 = vmul.f32 %v953, 0.03125
    %v956 = vmul.f32 %v954, 0.03125
    %v957 = vadd.f32 %v864, %v955
    %v958 = vadd.f32 %v865, %v956
    %v959 = vadd.f32 %v957, %v955
    %v960 = vadd.f32 %v958, %v956
    %v961 = vpack.c.bf16 %v960, %v959
    %962 = vmatprep.subr.bf16.mxu0 0
    %963 = vmatpush1.bf16.msra.mxu0 %v138
    %964 = vmatprep.subr.bf16.mxu0 0
    %965 = vmatpush1.bf16.msra.mxu0 %v139
    %966 = vmatprep.subr.bf16.mxu0 0
    %967 = vmatpush1.bf16.msra.mxu0 %v140
    %968 = vmatprep.subr.bf16.mxu0 0
    %969 = vmatpush1.bf16.msra.mxu0 %v141
    %970 = vmatprep.subr.bf16.mxu0 0
    %971 = vmatpush1.bf16.msra.mxu0 %v142
    %972 = vmatprep.subr.bf16.mxu0 0
    %973 = vmatpush1.bf16.msra.mxu0 %v143
    %974 = vmatprep.subr.bf16.mxu0 0
    %975 = vmatpush1.bf16.msra.mxu0 %v144
    %976 = vmatprep.subr.bf16.mxu0 0
    %977 = vmatpush1.bf16.msra.mxu0 %v145
    %978 = vmatprep.subr.bf16.mxu0 0
    %979 = vmatpush1.bf16.msra.mxu0 0
    %980 = vmatprep.subr.bf16.mxu0 0
    %981 = vmatpush1.bf16.msra.mxu0 0
    %982 = vmatprep.subr.bf16.mxu0 0
    %983 = vmatpush1.bf16.msra.mxu0 0
    %984 = vmatprep.subr.bf16.mxu0 0
    %985 = vmatpush1.bf16.msra.mxu0 0
    %986 = vmatprep.subr.bf16.mxu0 0
    %987 = vmatpush1.bf16.msra.mxu0 0
    %988 = vmatprep.subr.bf16.mxu0 0
    %989 = vmatpush1.bf16.msra.mxu0 0
    %990 = vmatprep.subr.bf16.mxu0 0
    %991 = vmatpush1.bf16.msra.mxu0 0
    %992 = vmatprep.subr.bf16.mxu0 0
    %993 = vmatpush1.bf16.msra.mxu0 0
    %994 = vmatprep.mubr.bf16.mxu0 0
    %995 = vmatmul.mubr.bf16.gmra.mrb[0].mxu0 %v961
    %v996 = vpop.f32.mrb[0].mxu0
    %v997 = vadd.f32 %v104, %v996
    %v998 = vpop.f32.mrb[0].mxu0
    %v999 = vpop.f32.mrb[0].mxu0
    %v1000 = vadd.f32 %v104, %v999
    %v1001 = vpop.f32.mrb[0].mxu0
    %1002 = vdwg.mxu0
    %v1003 = vpack.c.bf16 %v1000, %v997
    %v1004 = vtanh.bf16.pop %v1003
    %1005 = vmatprep.subr.bf16.mxu0 0
    %1006 = vmatpush1.bf16.msra.mxu0 %v235
    %1007 = vmatprep.subr.bf16.mxu0 0
    %1008 = vmatpush1.bf16.msra.mxu0 %v236
    %1009 = vmatprep.subr.bf16.mxu0 0
    %1010 = vmatpush1.bf16.msra.mxu0 %v237
    %1011 = vmatprep.subr.bf16.mxu0 0
    %1012 = vmatpush1.bf16.msra.mxu0 %v238
    %1013 = vmatprep.subr.bf16.mxu0 0
    %1014 = vmatpush1.bf16.msra.mxu0 %v239
    %1015 = vmatprep.subr.bf16.mxu0 0
    %1016 = vmatpush1.bf16.msra.mxu0 %v240
    %1017 = vmatprep.subr.bf16.mxu0 0
    %1018 = vmatpush1.bf16.msra.mxu0 %v241
    %1019 = vmatprep.subr.bf16.mxu0 0
    %1020 = vmatpush1.bf16.msra.mxu0 %v242
    %1021 = vmatprep.subr.bf16.mxu0 0
    %1022 = vmatpush1.bf16.msra.mxu0 0
    %1023 = vmatprep.subr.bf16.mxu0 0
    %1024 = vmatpush1.bf16.msra.mxu0 0
    %1025 = vmatprep.subr.bf16.mxu0 0
    %1026 = vmatpush1.bf16.msra.mxu0 0
    %1027 = vmatprep.subr.bf16.mxu0 0
    %1028 = vmatpush1.bf16.msra.mxu0 0
    %1029 = vmatprep.subr.bf16.mxu0 0
    %1030 = vmatpush1.bf16.msra.mxu0 0
    %1031 = vmatprep.subr.bf16.mxu0 0
    %1032 = vmatpush1.bf16.msra.mxu0 0
    %1033 = vmatprep.subr.bf16.mxu0 0
    %1034 = vmatpush1.bf16.msra.mxu0 0
    %1035 = vmatprep.subr.bf16.mxu0 0
    %1036 = vmatpush1.bf16.msra.mxu0 0
    %1037 = vmatprep.mubr.bf16.mxu0 0
    %1038 = vmatmul.mubr.bf16.gmra.mrb[0].mxu0 %v1004
    %v1039 = vpop.f32.mrb[0].mxu0
    %v1040 = vadd.f32 %v201, %v1039
    %v1041 = vpop.f32.mrb[0].mxu0
    %v1042 = vpop.f32.mrb[0].mxu0
    %v1043 = vadd.f32 %v201, %v1042
    %v1044 = vpop.f32.mrb[0].mxu0
    %1045 = vdwg.mxu0
    %v1046 = vmul.f32 %v1040, 2.0
    %v1047 = vmul.f32 %v1043, 2.0
    %v1048 = vsub.f32 %v1046, %v953
    %v1049 = vsub.f32 %v1047, %v954
    %v1050 = vmul.f32 %v1048, 0.03125
    %v1051 = vmul.f32 %v1049, 0.03125
    %v1052 = vadd.f32 %v959, %v1050
    %v1053 = vadd.f32 %v960, %v1051
    %v1054 = vadd.f32 %v1052, %v1050
    %v1055 = vadd.f32 %v1053, %v1051
    %v1056 = vpack.c.bf16 %v1055, %v1054
    %1057 = vmatprep.subr.bf16.mxu0 0
    %1058 = vmatpush1.bf16.msra.mxu0 %v138
    %1059 = vmatprep.subr.bf16.mxu0 0
    %1060 = vmatpush1.bf16.msra.mxu0 %v139
    %1061 = vmatprep.subr.bf16.mxu0 0
    %1062 = vmatpush1.bf16.msra.mxu0 %v140
    %1063 = vmatprep.subr.bf16.mxu0 0
    %1064 = vmatpush1.bf16.msra.mxu0 %v141
    %1065 = vmatprep.subr.bf16.mxu0 0
    %1066 = vmatpush1.bf16.msra.mxu0 %v142
    %1067 = vmatprep.subr.bf16.mxu0 0
    %1068 = vmatpush1.bf16.msra.mxu0 %v143
    %1069 = vmatprep.subr.bf16.mxu0 0
    %1070 = vmatpush1.bf16.msra.mxu0 %v144
    %1071 = vmatprep.subr.bf16.mxu0 0
    %1072 = vmatpush1.bf16.msra.mxu0 %v145
    %1073 = vmatprep.subr.bf16.mxu0 0
    %1074 = vmatpush1.bf16.msra.mxu0 0
    %1075 = vmatprep.subr.bf16.mxu0 0
    %1076 = vmatpush1.bf16.msra.mxu0 0
    %1077 = vmatprep.subr.bf16.mxu0 0
    %1078 = vmatpush1.bf16.msra.mxu0 0
    %1079 = vmatprep.subr.bf16.mxu0 0
    %1080 = vmatpush1.bf16.msra.mxu0 0
    %1081 = vmatprep.subr.bf16.mxu0 0
    %1082 = vmatpush1.bf16.msra.mxu0 0
    %1083 = vmatprep.subr.bf16.mxu0 0
    %1084 = vmatpush1.bf16.msra.mxu0 0
    %1085 = vmatprep.subr.bf16.mxu0 0
    %1086 = vmatpush1.bf16.msra.mxu0 0
    %1087 = vmatprep.subr.bf16.mxu0 0
    %1088 = vmatpush1.bf16.msra.mxu0 0
    %1089 = vmatprep.mubr.bf16.mxu0 0
    %1090 = vmatmul.mubr.bf16.gmra.mrb[0].mxu0 %v1056
    %v1091 = vpop.f32.mrb[0].mxu0
    %v1092 = vadd.f32 %v104, %v1091
    %v1093 = vpop.f32.mrb[0].mxu0
    %v1094 = vpop.f32.mrb[0].mxu0
    %v1095 = vadd.f32 %v104, %v1094
    %v1096 = vpop.f32.mrb[0].mxu0
    %1097 = vdwg.mxu0
    %v1098 = vpack.c.bf16 %v1095, %v1092
    %v1099 = vtanh.bf16.pop %v1098
    %1100 = vmatprep.subr.bf16.mxu0 0
    %1101 = vmatpush1.bf16.msra.mxu0 %v235
    %1102 = vmatprep.subr.bf16.mxu0 0
    %1103 = vmatpush1.bf16.msra.mxu0 %v236
    %1104 = vmatprep.subr.bf16.mxu0 0
    %1105 = vmatpush1.bf16.msra.mxu0 %v237
    %1106 = vmatprep.subr.bf16.mxu0 0
    %1107 = vmatpush1.bf16.msra.mxu0 %v238
    %1108 = vmatprep.subr.bf16.mxu0 0
    %1109 = vmatpush1.bf16.msra.mxu0 %v239
    %1110 = vmatprep.subr.bf16.mxu0 0
    %1111 = vmatpush1.bf16.msra.mxu0 %v240
    %1112 = vmatprep.subr.bf16.mxu0 0
    %1113 = vmatpush1.bf16.msra.mxu0 %v241
    %1114 = vmatprep.subr.bf16.mxu0 0
    %1115 = vmatpush1.bf16.msra.mxu0 %v242
    %1116 = vmatprep.subr.bf16.mxu0 0
    %1117 = vmatpush1.bf16.msra.mxu0 0
    %1118 = vmatprep.subr.bf16.mxu0 0
    %1119 = vmatpush1.bf16.msra.mxu0 0
    %1120 = vmatprep.subr.bf16.mxu0 0
    %1121 = vmatpush1.bf16.msra.mxu0 0
    %1122 = vmatprep.subr.bf16.mxu0 0
    %1123 = vmatpush1.bf16.msra.mxu0 0
    %1124 = vmatprep.subr.bf16.mxu0 0
    %1125 = vmatpush1.bf16.msra.mxu0 0
    %1126 = vmatprep.subr.bf16.mxu0 0
    %1127 = vmatpush1.bf16.msra.mxu0 0
    %1128 = vmatprep.subr.bf16.mxu0 0
    %1129 = vmatpush1.bf16.msra.mxu0 0
    %1130 = vmatprep.subr.bf16.mxu0 0
    %1131 = vmatpush1.bf16.msra.mxu0 0
    %1132 = vmatprep.mubr.bf16.mxu0 0
    %1133 = vmatmul.mubr.bf16.gmra.mrb[0].mxu0 %v1099
    %v1134 = vpop.f32.mrb[0].mxu0
    %v1135 = vadd.f32 %v201, %v1134
    %v1136 = vpop.f32.mrb[0].mxu0
    %v1137 = vpop.f32.mrb[0].mxu0
    %v1138 = vadd.f32 %v201, %v1137
    %v1139 = vpop.f32.mrb[0].mxu0
    %1140 = vdwg.mxu0
    %v1141 = vmul.f32 %v1135, 2.0
    %v1142 = vmul.f32 %v1138, 2.0
    %v1143 = vsub.f32 %v1141, %v1048
    %v1144 = vsub.f32 %v1142, %v1049
    %v1145 = vmul.f32 %v1143, 0.03125
    %v1146 = vmul.f32 %v1144, 0.03125
    %v1147 = vadd.f32 %v1054, %v1145
    %v1148 = vadd.f32 %v1055, %v1146
    %v1149 = vadd.f32 %v1147, %v1145
    %v1150 = vadd.f32 %v1148, %v1146
    %v1151 = vpack.c.bf16 %v1150, %v1149
    %1152 = vmatprep.subr.bf16.mxu0 0
    %1153 = vmatpush1.bf16.msra.mxu0 %v138
    %1154 = vmatprep.subr.bf16.mxu0 0
    %1155 = vmatpush1.bf16.msra.mxu0 %v139
    %1156 = vmatprep.subr.bf16.mxu0 0
    %1157 = vmatpush1.bf16.msra.mxu0 %v140
    %1158 = vmatprep.subr.bf16.mxu0 0
    %1159 = vmatpush1.bf16.msra.mxu0 %v141
    %1160 = vmatprep.subr.bf16.mxu0 0
    %1161 = vmatpush1.bf16.msra.mxu0 %v142
    %1162 = vmatprep.subr.bf16.mxu0 0
    %1163 = vmatpush1.bf16.msra.mxu0 %v143
    %1164 = vmatprep.subr.bf16.mxu0 0
    %1165 = vmatpush1.bf16.msra.mxu0 %v144
    %1166 = vmatprep.subr.bf16.mxu0 0
    %1167 = vmatpush1.bf16.msra.mxu0 %v145
    %1168 = vmatprep.subr.bf16.mxu0 0
    %1169 = vmatpush1.bf16.msra.mxu0 0
    %1170 = vmatprep.subr.bf16.mxu0 0
    %1171 = vmatpush1.bf16.msra.mxu0 0
    %1172 = vmatprep.subr.bf16.mxu0 0
    %1173 = vmatpush1.bf16.msra.mxu0 0
    %1174 = vmatprep.subr.bf16.mxu0 0
    %1175 = vmatpush1.bf16.msra.mxu0 0
    %1176 = vmatprep.subr.bf16.mxu0 0
    %1177 = vmatpush1.bf16.msra.mxu0 0
    %1178 = vmatprep.subr.bf16.mxu0 0
    %1179 = vmatpush1.bf16.msra.mxu0 0
    %1180 = vmatprep.subr.bf16.mxu0 0
    %1181 = vmatpush1.bf16.msra.mxu0 0
    %1182 = vmatprep.subr.bf16.mxu0 0
    %1183 = vmatpush1.bf16.msra.mxu0 0
    %1184 = vmatprep.mubr.bf16.mxu0 0
    %1185 = vmatmul.mubr.bf16.gmra.mrb[0].mxu0 %v1151
    %v1186 = vpop.f32.mrb[0].mxu0
    %v1187 = vadd.f32 %v104, %v1186
    %v1188 = vpop.f32.mrb[0].mxu0
    %v1189 = vpop.f32.mrb[0].mxu0
    %v1190 = vadd.f32 %v104, %v1189
    %v1191 = vpop.f32.mrb[0].mxu0
    %1192 = vdwg.mxu0
    %v1193 = vpack.c.bf16 %v1190, %v1187
    %v1194 = vtanh.bf16.pop %v1193
    %1195 = vmatprep.subr.bf16.mxu0 0
    %1196 = vmatpush1.bf16.msra.mxu0 %v235
    %1197 = vmatprep.subr.bf16.mxu0 0
    %1198 = vmatpush1.bf16.msra.mxu0 %v236
    %1199 = vmatprep.subr.bf16.mxu0 0
    %1200 = vmatpush1.bf16.msra.mxu0 %v237
    %1201 = vmatprep.subr.bf16.mxu0 0
    %1202 = vmatpush1.bf16.msra.mxu0 %v238
    %1203 = vmatprep.subr.bf16.mxu0 0
    %1204 = vmatpush1.bf16.msra.mxu0 %v239
    %1205 = vmatprep.subr.bf16.mxu0 0
    %1206 = vmatpush1.bf16.msra.mxu0 %v240
    %1207 = vmatprep.subr.bf16.mxu0 0
    %1208 = vmatpush1.bf16.msra.mxu0 %v241
    %1209 = vmatprep.subr.bf16.mxu0 0
    %1210 = vmatpush1.bf16.msra.mxu0 %v242
    %1211 = vmatprep.subr.bf16.mxu0 0
    %1212 = vmatpush1.bf16.msra.mxu0 0
    %1213 = vmatprep.subr.bf16.mxu0 0
    %1214 = vmatpush1.bf16.msra.mxu0 0
    %1215 = vmatprep.subr.bf16.mxu0 0
    %1216 = vmatpush1.bf16.msra.mxu0 0
    %1217 = vmatprep.subr.bf16.mxu0 0
    %1218 = vmatpush1.bf16.msra.mxu0 0
    %1219 = vmatprep.subr.bf16.mxu0 0
    %1220 = vmatpush1.bf16.msra.mxu0 0
    %1221 = vmatprep.subr.bf16.mxu0 0
    %1222 = vmatpush1.bf16.msra.mxu0 0
    %1223 = vmatprep.subr.bf16.mxu0 0
    %1224 = vmatpush1.bf16.msra.mxu0 0
    %1225 = vmatprep.subr.bf16.mxu0 0
    %1226 = vmatpush1.bf16.msra.mxu0 0
    %1227 = vmatprep.mubr.bf16.mxu0 0
    %1228 = vmatmul.mubr.bf16.gmra.mrb[0].mxu0 %v1194
    %v1229 = vpop.f32.mrb[0].mxu0
    %v1230 = vadd.f32 %v201, %v1229
    %v1231 = vpop.f32.mrb[0].mxu0
    %v1232 = vpop.f32.mrb[0].mxu0
    %v1233 = vadd.f32 %v201, %v1232
    %v1234 = vpop.f32.mrb[0].mxu0
    %1235 = vdwg.mxu0
    %v1236 = vmul.f32 %v1230, 2.0
    %v1237 = vmul.f32 %v1233, 2.0
    %v1238 = vsub.f32 %v1236, %v1143
    %v1239 = vsub.f32 %v1237, %v1144
    %v1240 = vmul.f32 %v1238, 0.03125
    %v1241 = vmul.f32 %v1239, 0.03125
    %v1242 = vadd.f32 %v1149, %v1240
    %v1243 = vadd.f32 %v1150, %v1241
    %v1244 = vadd.f32 %v1242, %v1240
    %v1245 = vadd.f32 %v1243, %v1241
    %v1246 = vpack.c.bf16 %v1245, %v1244
    %1247 = vmatprep.subr.bf16.mxu0 0
    %1248 = vmatpush1.bf16.msra.mxu0 %v138
    %1249 = vmatprep.subr.bf16.mxu0 0
    %1250 = vmatpush1.bf16.msra.mxu0 %v139
    %1251 = vmatprep.subr.bf16.mxu0 0
    %1252 = vmatpush1.bf16.msra.mxu0 %v140
    %1253 = vmatprep.subr.bf16.mxu0 0
    %1254 = vmatpush1.bf16.msra.mxu0 %v141
    %1255 = vmatprep.subr.bf16.mxu0 0
    %1256 = vmatpush1.bf16.msra.mxu0 %v142
    %1257 = vmatprep.subr.bf16.mxu0 0
    %1258 = vmatpush1.bf16.msra.mxu0 %v143
    %1259 = vmatprep.subr.bf16.mxu0 0
    %1260 = vmatpush1.bf16.msra.mxu0 %v144
    %1261 = vmatprep.subr.bf16.mxu0 0
    %1262 = vmatpush1.bf16.msra.mxu0 %v145
    %1263 = vmatprep.subr.bf16.mxu0 0
    %1264 = vmatpush1.bf16.msra.mxu0 0
    %1265 = vmatprep.subr.bf16.mxu0 0
    %1266 = vmatpush1.bf16.msra.mxu0 0
    %1267 = vmatprep.subr.bf16.mxu0 0
    %1268 = vmatpush1.bf16.msra.mxu0 0
    %1269 = vmatprep.subr.bf16.mxu0 0
    %1270 = vmatpush1.bf16.msra.mxu0 0
    %1271 = vmatprep.subr.bf16.mxu0 0
    %1272 = vmatpush1.bf16.msra.mxu0 0
    %1273 = vmatprep.subr.bf16.mxu0 0
    %1274 = vmatpush1.bf16.msra.mxu0 0
    %1275 = vmatprep.subr.bf16.mxu0 0
    %1276 = vmatpush1.bf16.msra.mxu0 0
    %1277 = vmatprep.subr.bf16.mxu0 0
    %1278 = vmatpush1.bf16.msra.mxu0 0
    %1279 = vmatprep.mubr.bf16.mxu0 0
    %1280 = vmatmul.mubr.bf16.gmra.mrb[0].mxu0 %v1246
    %v1281 = vpop.f32.mrb[0].mxu0
    %v1282 = vadd.f32 %v104, %v1281
    %v1283 = vpop.f32.mrb[0].mxu0
    %v1284 = vpop.f32.mrb[0].mxu0
    %v1285 = vadd.f32 %v104, %v1284
    %v1286 = vpop.f32.mrb[0].mxu0
    %1287 = vdwg.mxu0
    %v1288 = vpack.c.bf16 %v1285, %v1282
    %v1289 = vtanh.bf16.pop %v1288
    %1290 = vmatprep.subr.bf16.mxu0 0
    %1291 = vmatpush1.bf16.msra.mxu0 %v235
    %1292 = vmatprep.subr.bf16.mxu0 0
    %1293 = vmatpush1.bf16.msra.mxu0 %v236
    %1294 = vmatprep.subr.bf16.mxu0 0
    %1295 = vmatpush1.bf16.msra.mxu0 %v237
    %1296 = vmatprep.subr.bf16.mxu0 0
    %1297 = vmatpush1.bf16.msra.mxu0 %v238
    %1298 = vmatprep.subr.bf16.mxu0 0
    %1299 = vmatpush1.bf16.msra.mxu0 %v239
    %1300 = vmatprep.subr.bf16.mxu0 0
    %1301 = vmatpush1.bf16.msra.mxu0 %v240
    %1302 = vmatprep.subr.bf16.mxu0 0
    %1303 = vmatpush1.bf16.msra.mxu0 %v241
    %1304 = vmatprep.subr.bf16.mxu0 0
    %1305 = vmatpush1.bf16.msra.mxu0 %v242
    %1306 = vmatprep.subr.bf16.mxu0 0
    %1307 = vmatpush1.bf16.msra.mxu0 0
    %1308 = vmatprep.subr.bf16.mxu0 0
    %1309 = vmatpush1.bf16.msra.mxu0 0
    %1310 = vmatprep.subr.bf16.mxu0 0
    %1311 = vmatpush1.bf16.msra.mxu0 0
    %1312 = vmatprep.subr.bf16.mxu0 0
    %1313 = vmatpush1.bf16.msra.mxu0 0
    %1314 = vmatprep.subr.bf16.mxu0 0
    %1315 = vmatpush1.bf16.msra.mxu0 0
    %1316 = vmatprep.subr.bf16.mxu0 0
    %1317 = vmatpush1.bf16.msra.mxu0 0
    %1318 = vmatprep.subr.bf16.mxu0 0
    %1319 = vmatpush1.bf16.msra.mxu0 0
    %1320 = vmatprep.subr.bf16.mxu0 0
    %1321 = vmatpush1.bf16.msra.mxu0 0
    %1322 = vmatprep.mubr.bf16.mxu0 0
    %1323 = vmatmul.mubr.bf16.gmra.mrb[0].mxu0 %v1289
    %v1324 = vpop.f32.mrb[0].mxu0
    %v1325 = vadd.f32 %v201, %v1324
    %v1326 = vpop.f32.mrb[0].mxu0
    %v1327 = vpop.f32.mrb[0].mxu0
    %v1328 = vadd.f32 %v201, %v1327
    %v1329 = vpop.f32.mrb[0].mxu0
    %1330 = vdwg.mxu0
    %v1331 = vmul.f32 %v1325, 2.0
    %v1332 = vmul.f32 %v1328, 2.0
    %v1333 = vsub.f32 %v1331, %v1238
    %v1334 = vsub.f32 %v1332, %v1239
    %v1335 = vmul.f32 %v1333, 0.03125
    %v1336 = vmul.f32 %v1334, 0.03125
    %v1337 = vadd.f32 %v1244, %v1335
    %v1338 = vadd.f32 %v1245, %v1336
    %v1339 = vadd.f32 %v1337, %v1335
    %v1340 = vadd.f32 %v1338, %v1336
    %v1341 = vpack.c.bf16 %v1340, %v1339
    %1342 = vmatprep.subr.bf16.mxu0 0
    %1343 = vmatpush1.bf16.msra.mxu0 %v138
    %1344 = vmatprep.subr.bf16.mxu0 0
    %1345 = vmatpush1.bf16.msra.mxu0 %v139
    %1346 = vmatprep.subr.bf16.mxu0 0
    %1347 = vmatpush1.bf16.msra.mxu0 %v140
    %1348 = vmatprep.subr.bf16.mxu0 0
    %1349 = vmatpush1.bf16.msra.mxu0 %v141
    %1350 = vmatprep.subr.bf16.mxu0 0
    %1351 = vmatpush1.bf16.msra.mxu0 %v142
    %1352 = vmatprep.subr.bf16.mxu0 0
    %1353 = vmatpush1.bf16.msra.mxu0 %v143
    %1354 = vmatprep.subr.bf16.mxu0 0
    %1355 = vmatpush1.bf16.msra.mxu0 %v144
    %1356 = vmatprep.subr.bf16.mxu0 0
    %1357 = vmatpush1.bf16.msra.mxu0 %v145
    %1358 = vmatprep.subr.bf16.mxu0 0
    %1359 = vmatpush1.bf16.msra.mxu0 0
    %1360 = vmatprep.subr.bf16.mxu0 0
    %1361 = vmatpush1.bf16.msra.mxu0 0
    %1362 = vmatprep.subr.bf16.mxu0 0
    %1363 = vmatpush1.bf16.msra.mxu0 0
    %1364 = vmatprep.subr.bf16.mxu0 0
    %1365 = vmatpush1.bf16.msra.mxu0 0
    %1366 = vmatprep.subr.bf16.mxu0 0
    %1367 = vmatpush1.bf16.msra.mxu0 0
    %1368 = vmatprep.subr.bf16.mxu0 0
    %1369 = vmatpush1.bf16.msra.mxu0 0
    %1370 = vmatprep.subr.bf16.mxu0 0
    %1371 = vmatpush1.bf16.msra.mxu0 0
    %1372 = vmatprep.subr.bf16.mxu0 0
    %1373 = vmatpush1.bf16.msra.mxu0 0
    %1374 = vmatprep.mubr.bf16.mxu0 0
    %1375 = vmatmul.mubr.bf16.gmra.mrb[0].mxu0 %v1341
    %v1376 = vpop.f32.mrb[0].mxu0
    %v1377 = vadd.f32 %v104, %v1376
    %v1378 = vpop.f32.mrb[0].mxu0
    %v1379 = vpop.f32.mrb[0].mxu0
    %v1380 = vadd.f32 %v104, %v1379
    %v1381 = vpop.f32.mrb[0].mxu0
    %1382 = vdwg.mxu0
    %v1383 = vpack.c.bf16 %v1380, %v1377
    %v1384 = vtanh.bf16.pop %v1383
    %1385 = vmatprep.subr.bf16.mxu0 0
    %1386 = vmatpush1.bf16.msra.mxu0 %v235
    %1387 = vmatprep.subr.bf16.mxu0 0
    %1388 = vmatpush1.bf16.msra.mxu0 %v236
    %1389 = vmatprep.subr.bf16.mxu0 0
    %1390 = vmatpush1.bf16.msra.mxu0 %v237
    %1391 = vmatprep.subr.bf16.mxu0 0
    %1392 = vmatpush1.bf16.msra.mxu0 %v238
    %1393 = vmatprep.subr.bf16.mxu0 0
    %1394 = vmatpush1.bf16.msra.mxu0 %v239
    %1395 = vmatprep.subr.bf16.mxu0 0
    %1396 = vmatpush1.bf16.msra.mxu0 %v240
    %1397 = vmatprep.subr.bf16.mxu0 0
    %1398 = vmatpush1.bf16.msra.mxu0 %v241
    %1399 = vmatprep.subr.bf16.mxu0 0
    %1400 = vmatpush1.bf16.msra.mxu0 %v242
    %1401 = vmatprep.subr.bf16.mxu0 0
    %1402 = vmatpush1.bf16.msra.mxu0 0
    %1403 = vmatprep.subr.bf16.mxu0 0
    %1404 = vmatpush1.bf16.msra.mxu0 0
    %1405 = vmatprep.subr.bf16.mxu0 0
    %1406 = vmatpush1.bf16.msra.mxu0 0
    %1407 = vmatprep.subr.bf16.mxu0 0
    %1408 = vmatpush1.bf16.msra.mxu0 0
    %1409 = vmatprep.subr.bf16.mxu0 0
    %1410 = vmatpush1.bf16.msra.mxu0 0
    %1411 = vmatprep.subr.bf16.mxu0 0
    %1412 = vmatpush1.bf16.msra.mxu0 0
    %1413 = vmatprep.subr.bf16.mxu0 0
    %1414 = vmatpush1.bf16.msra.mxu0 0
    %1415 = vmatprep.subr.bf16.mxu0 0
    %1416 = vmatpush1.bf16.msra.mxu0 0
    %1417 = vmatprep.mubr.bf16.mxu0 0
    %1418 = vmatmul.mubr.bf16.gmra.mrb[0].mxu0 %v1384
    %v1419 = vpop.f32.mrb[0].mxu0
    %v1420 = vadd.f32 %v201, %v1419
    %v1421 = vpop.f32.mrb[0].mxu0
    %v1422 = vpop.f32.mrb[0].mxu0
    %v1423 = vadd.f32 %v201, %v1422
    %v1424 = vpop.f32.mrb[0].mxu0
    %1425 = vdwg.mxu0
    %v1426 = vmul.f32 %v1420, 2.0
    %v1427 = vmul.f32 %v1423, 2.0
    %v1428 = vsub.f32 %v1426, %v1333
    %v1429 = vsub.f32 %v1427, %v1334
    %v1430 = vmul.f32 %v1428, 0.03125
    %v1431 = vmul.f32 %v1429, 0.03125
    %v1432 = vadd.f32 %v1339, %v1430
    %v1433 = vadd.f32 %v1340, %v1431
    %v1434 = vadd.f32 %v1432, %v1430
    %v1435 = vadd.f32 %v1433, %v1431
    %v1436 = vpack.c.bf16 %v1435, %v1434
    %1437 = vmatprep.subr.bf16.mxu0 0
    %1438 = vmatpush1.bf16.msra.mxu0 %v138
    %1439 = vmatprep.subr.bf16.mxu0 0
    %1440 = vmatpush1.bf16.msra.mxu0 %v139
    %1441 = vmatprep.subr.bf16.mxu0 0
    %1442 = vmatpush1.bf16.msra.mxu0 %v140
    %1443 = vmatprep.subr.bf16.mxu0 0
    %1444 = vmatpush1.bf16.msra.mxu0 %v141
    %1445 = vmatprep.subr.bf16.mxu0 0
    %1446 = vmatpush1.bf16.msra.mxu0 %v142
    %1447 = vmatprep.subr.bf16.mxu0 0
    %1448 = vmatpush1.bf16.msra.mxu0 %v143
    %1449 = vmatprep.subr.bf16.mxu0 0
    %1450 = vmatpush1.bf16.msra.mxu0 %v144
    %1451 = vmatprep.subr.bf16.mxu0 0
    %1452 = vmatpush1.bf16.msra.mxu0 %v145
    %1453 = vmatprep.subr.bf16.mxu0 0
    %1454 = vmatpush1.bf16.msra.mxu0 0
    %1455 = vmatprep.subr.bf16.mxu0 0
    %1456 = vmatpush1.bf16.msra.mxu0 0
    %1457 = vmatprep.subr.bf16.mxu0 0
    %1458 = vmatpush1.bf16.msra.mxu0 0
    %1459 = vmatprep.subr.bf16.mxu0 0
    %1460 = vmatpush1.bf16.msra.mxu0 0
    %1461 = vmatprep.subr.bf16.mxu0 0
    %1462 = vmatpush1.bf16.msra.mxu0 0
    %1463 = vmatprep.subr.bf16.mxu0 0
    %1464 = vmatpush1.bf16.msra.mxu0 0
    %1465 = vmatprep.subr.bf16.mxu0 0
    %1466 = vmatpush1.bf16.msra.mxu0 0
    %1467 = vmatprep.subr.bf16.mxu0 0
    %1468 = vmatpush1.bf16.msra.mxu0 0
    %1469 = vmatprep.mubr.bf16.mxu0 0
    %1470 = vmatmul.mubr.bf16.gmra.mrb[0].mxu0 %v1436
    %v1471 = vpop.f32.mrb[0].mxu0
    %v1472 = vadd.f32 %v104, %v1471
    %v1473 = vpop.f32.mrb[0].mxu0
    %v1474 = vpop.f32.mrb[0].mxu0
    %v1475 = vadd.f32 %v104, %v1474
    %v1476 = vpop.f32.mrb[0].mxu0
    %1477 = vdwg.mxu0
    %v1478 = vpack.c.bf16 %v1475, %v1472
    %v1479 = vtanh.bf16.pop %v1478
    %1480 = vmatprep.subr.bf16.mxu0 0
    %1481 = vmatpush1.bf16.msra.mxu0 %v235
    %1482 = vmatprep.subr.bf16.mxu0 0
    %1483 = vmatpush1.bf16.msra.mxu0 %v236
    %1484 = vmatprep.subr.bf16.mxu0 0
    %1485 = vmatpush1.bf16.msra.mxu0 %v237
    %1486 = vmatprep.subr.bf16.mxu0 0
    %1487 = vmatpush1.bf16.msra.mxu0 %v238
    %1488 = vmatprep.subr.bf16.mxu0 0
    %1489 = vmatpush1.bf16.msra.mxu0 %v239
    %1490 = vmatprep.subr.bf16.mxu0 0
    %1491 = vmatpush1.bf16.msra.mxu0 %v240
    %1492 = vmatprep.subr.bf16.mxu0 0
    %1493 = vmatpush1.bf16.msra.mxu0 %v241
    %1494 = vmatprep.subr.bf16.mxu0 0
    %1495 = vmatpush1.bf16.msra.mxu0 %v242
    %1496 = vmatprep.subr.bf16.mxu0 0
    %1497 = vmatpush1.bf16.msra.mxu0 0
    %1498 = vmatprep.subr.bf16.mxu0 0
    %1499 = vmatpush1.bf16.msra.mxu0 0
    %1500 = vmatprep.subr.bf16.mxu0 0
    %1501 = vmatpush1.bf16.msra.mxu0 0
    %1502 = vmatprep.subr.bf16.mxu0 0
    %1503 = vmatpush1.bf16.msra.mxu0 0
    %1504 = vmatprep.subr.bf16.mxu0 0
    %1505 = vmatpush1.bf16.msra.mxu0 0
    %1506 = vmatprep.subr.bf16.mxu0 0
    %1507 = vmatpush1.bf16.msra.mxu0 0
    %1508 = vmatprep.subr.bf16.mxu0 0
    %1509 = vmatpush1.bf16.msra.mxu0 0
    %1510 = vmatprep.subr.bf16.mxu0 0
    %1511 = vmatpush1.bf16.msra.mxu0 0
    %1512 = vmatprep.mubr.bf16.mxu0 0
    %1513 = vmatmul.mubr.bf16.gmra.mrb[0].mxu0 %v1479
    %v1514 = vpop.f32.mrb[0].mxu0
    %v1515 = vadd.f32 %v201, %v1514
    %v1516 = vpop.f32.mrb[0].mxu0
    %v1517 = vpop.f32.mrb[0].mxu0
    %v1518 = vadd.f32 %v201, %v1517
    %v1519 = vpop.f32.mrb[0].mxu0
    %1520 = vdwg.mxu0
    %v1521 = vmul.f32 %v1515, 2.0
    %v1522 = vmul.f32 %v1518, 2.0
    %v1523 = vsub.f32 %v1521, %v1428
    %v1524 = vsub.f32 %v1522, %v1429
    %v1525 = vmul.f32 %v1523, 0.03125
    %v1526 = vmul.f32 %v1524, 0.03125
    %v1527 = vadd.f32 %v1434, %v1525
    %v1528 = vadd.f32 %v1435, %v1526
    %v1529 = vadd.f32 %v1527, %v1525
    %v1530 = vadd.f32 %v1528, %v1526
    %v1531 = vpack.c.bf16 %v1530, %v1529
    %1532 = vmatprep.subr.bf16.mxu0 0
    %1533 = vmatpush1.bf16.msra.mxu0 %v138
    %1534 = vmatprep.subr.bf16.mxu0 0
    %1535 = vmatpush1.bf16.msra.mxu0 %v139
    %1536 = vmatprep.subr.bf16.mxu0 0
    %1537 = vmatpush1.bf16.msra.mxu0 %v140
    %1538 = vmatprep.subr.bf16.mxu0 0
    %1539 = vmatpush1.bf16.msra.mxu0 %v141
    %1540 = vmatprep.subr.bf16.mxu0 0
    %1541 = vmatpush1.bf16.msra.mxu0 %v142
    %1542 = vmatprep.subr.bf16.mxu0 0
    %1543 = vmatpush1.bf16.msra.mxu0 %v143
    %1544 = vmatprep.subr.bf16.mxu0 0
    %1545 = vmatpush1.bf16.msra.mxu0 %v144
    %1546 = vmatprep.subr.bf16.mxu0 0
    %1547 = vmatpush1.bf16.msra.mxu0 %v145
    %1548 = vmatprep.subr.bf16.mxu0 0
    %1549 = vmatpush1.bf16.msra.mxu0 0
    %1550 = vmatprep.subr.bf16.mxu0 0
    %1551 = vmatpush1.bf16.msra.mxu0 0
    %1552 = vmatprep.subr.bf16.mxu0 0
    %1553 = vmatpush1.bf16.msra.mxu0 0
    %1554 = vmatprep.subr.bf16.mxu0 0
    %1555 = vmatpush1.bf16.msra.mxu0 0
    %1556 = vmatprep.subr.bf16.mxu0 0
    %1557 = vmatpush1.bf16.msra.mxu0 0
    %1558 = vmatprep.subr.bf16.mxu0 0
    %1559 = vmatpush1.bf16.msra.mxu0 0
    %1560 = vmatprep.subr.bf16.mxu0 0
    %1561 = vmatpush1.bf16.msra.mxu0 0
    %1562 = vmatprep.subr.bf16.mxu0 0
    %1563 = vmatpush1.bf16.msra.mxu0 0
    %1564 = vmatprep.mubr.bf16.mxu0 0
    %1565 = vmatmul.mubr.bf16.gmra.mrb[0].mxu0 %v1531
    %v1566 = vpop.f32.mrb[0].mxu0
    %v1567 = vadd.f32 %v104, %v1566
    %v1568 = vpop.f32.mrb[0].mxu0
    %v1569 = vpop.f32.mrb[0].mxu0
    %v1570 = vadd.f32 %v104, %v1569
    %v1571 = vpop.f32.mrb[0].mxu0
    %1572 = vdwg.mxu0
    %v1573 = vpack.c.bf16 %v1570, %v1567
    %v1574 = vtanh.bf16.pop %v1573
    %1575 = vmatprep.subr.bf16.mxu0 0
    %1576 = vmatpush1.bf16.msra.mxu0 %v235
    %1577 = vmatprep.subr.bf16.mxu0 0
    %1578 = vmatpush1.bf16.msra.mxu0 %v236
    %1579 = vmatprep.subr.bf16.mxu0 0
    %1580 = vmatpush1.bf16.msra.mxu0 %v237
    %1581 = vmatprep.subr.bf16.mxu0 0
    %1582 = vmatpush1.bf16.msra.mxu0 %v238
    %1583 = vmatprep.subr.bf16.mxu0 0
    %1584 = vmatpush1.bf16.msra.mxu0 %v239
    %1585 = vmatprep.subr.bf16.mxu0 0
    %1586 = vmatpush1.bf16.msra.mxu0 %v240
    %1587 = vmatprep.subr.bf16.mxu0 0
    %1588 = vmatpush1.bf16.msra.mxu0 %v241
    %1589 = vmatprep.subr.bf16.mxu0 0
    %1590 = vmatpush1.bf16.msra.mxu0 %v242
    %1591 = vmatprep.subr.bf16.mxu0 0
    %1592 = vmatpush1.bf16.msra.mxu0 0
    %1593 = vmatprep.subr.bf16.mxu0 0
    %1594 = vmatpush1.bf16.msra.mxu0 0
    %1595 = vmatprep.subr.bf16.mxu0 0
    %1596 = vmatpush1.bf16.msra.mxu0 0
    %1597 = vmatprep.subr.bf16.mxu0 0
    %1598 = vmatpush1.bf16.msra.mxu0 0
    %1599 = vmatprep.subr.bf16.mxu0 0
    %1600 = vmatpush1.bf16.msra.mxu0 0
    %1601 = vmatprep.subr.bf16.mxu0 0
    %1602 = vmatpush1.bf16.msra.mxu0 0
    %1603 = vmatprep.subr.bf16.mxu0 0
    %1604 = vmatpush1.bf16.msra.mxu0 0
    %1605 = vmatprep.subr.bf16.mxu0 0
    %1606 = vmatpush1.bf16.msra.mxu0 0
    %1607 = vmatprep.mubr.bf16.mxu0 0
    %1608 = vmatmul.mubr.bf16.gmra.mrb[0].mxu0 %v1574
    %v1609 = vpop.f32.mrb[0].mxu0
    %v1610 = vadd.f32 %v201, %v1609
    %v1611 = vpop.f32.mrb[0].mxu0
    %v1612 = vpop.f32.mrb[0].mxu0
    %v1613 = vadd.f32 %v201, %v1612
    %v1614 = vpop.f32.mrb[0].mxu0
    %1615 = vdwg.mxu0
    %v1616 = vmul.f32 %v1610, 2.0
    %v1617 = vmul.f32 %v1613, 2.0
    %v1618 = vsub.f32 %v1616, %v1523
    %v1619 = vsub.f32 %v1617, %v1524
    %v1620 = vmul.f32 %v1618, 0.03125
    %v1621 = vmul.f32 %v1619, 0.03125
    %v1622 = vadd.f32 %v1529, %v1620
    %v1623 = vadd.f32 %v1530, %v1621
    %v1624 = vadd.f32 %v1622, %v1620
    %v1625 = vadd.f32 %v1623, %v1621
    %v1626 = vpack.c.bf16 %v1625, %v1624
    %1627 = vmatprep.subr.bf16.mxu0 0
    %1628 = vmatpush1.bf16.msra.mxu0 %v138
    %1629 = vmatprep.subr.bf16.mxu0 0
    %1630 = vmatpush1.bf16.msra.mxu0 %v139
    %1631 = vmatprep.subr.bf16.mxu0 0
    %1632 = vmatpush1.bf16.msra.mxu0 %v140
    %1633 = vmatprep.subr.bf16.mxu0 0
    %1634 = vmatpush1.bf16.msra.mxu0 %v141
    %1635 = vmatprep.subr.bf16.mxu0 0
    %1636 = vmatpush1.bf16.msra.mxu0 %v142
    %1637 = vmatprep.subr.bf16.mxu0 0
    %1638 = vmatpush1.bf16.msra.mxu0 %v143
    %1639 = vmatprep.subr.bf16.mxu0 0
    %1640 = vmatpush1.bf16.msra.mxu0 %v144
    %1641 = vmatprep.subr.bf16.mxu0 0
    %1642 = vmatpush1.bf16.msra.mxu0 %v145
    %1643 = vmatprep.subr.bf16.mxu0 0
    %1644 = vmatpush1.bf16.msra.mxu0 0
    %1645 = vmatprep.subr.bf16.mxu0 0
    %1646 = vmatpush1.bf16.msra.mxu0 0
    %1647 = vmatprep.subr.bf16.mxu0 0
    %1648 = vmatpush1.bf16.msra.mxu0 0
    %1649 = vmatprep.subr.bf16.mxu0 0
    %1650 = vmatpush1.bf16.msra.mxu0 0
    %1651 = vmatprep.subr.bf16.mxu0 0
    %1652 = vmatpush1.bf16.msra.mxu0 0
    %1653 = vmatprep.subr.bf16.mxu0 0
    %1654 = vmatpush1.bf16.msra.mxu0 0
    %1655 = vmatprep.subr.bf16.mxu0 0
    %1656 = vmatpush1.bf16.msra.mxu0 0
    %1657 = vmatprep.subr.bf16.mxu0 0
    %1658 = vmatpush1.bf16.msra.mxu0 0
    %1659 = vmatprep.mubr.bf16.mxu0 0
    %1660 = vmatmul.mubr.bf16.gmra.mrb[0].mxu0 %v1626
    %v1661 = vpop.f32.mrb[0].mxu0
    %v1662 = vadd.f32 %v104, %v1661
    %v1663 = vpop.f32.mrb[0].mxu0
    %v1664 = vpop.f32.mrb[0].mxu0
    %v1665 = vadd.f32 %v104, %v1664
    %v1666 = vpop.f32.mrb[0].mxu0
    %1667 = vdwg.mxu0
    %v1668 = vpack.c.bf16 %v1665, %v1662
    %v1669 = vtanh.bf16.pop %v1668
    %1670 = vmatprep.subr.bf16.mxu0 0
    %1671 = vmatpush1.bf16.msra.mxu0 %v235
    %1672 = vmatprep.subr.bf16.mxu0 0
    %1673 = vmatpush1.bf16.msra.mxu0 %v236
    %1674 = vmatprep.subr.bf16.mxu0 0
    %1675 = vmatpush1.bf16.msra.mxu0 %v237
    %1676 = vmatprep.subr.bf16.mxu0 0
    %1677 = vmatpush1.bf16.msra.mxu0 %v238
    %1678 = vmatprep.subr.bf16.mxu0 0
    %1679 = vmatpush1.bf16.msra.mxu0 %v239
    %1680 = vmatprep.subr.bf16.mxu0 0
    %1681 = vmatpush1.bf16.msra.mxu0 %v240
    %1682 = vmatprep.subr.bf16.mxu0 0
    %1683 = vmatpush1.bf16.msra.mxu0 %v241
    %1684 = vmatprep.subr.bf16.mxu0 0
    %1685 = vmatpush1.bf16.msra.mxu0 %v242
    %1686 = vmatprep.subr.bf16.mxu0 0
    %1687 = vmatpush1.bf16.msra.mxu0 0
    %1688 = vmatprep.subr.bf16.mxu0 0
    %1689 = vmatpush1.bf16.msra.mxu0 0
    %1690 = vmatprep.subr.bf16.mxu0 0
    %1691 = vmatpush1.bf16.msra.mxu0 0
    %1692 = vmatprep.subr.bf16.mxu0 0
    %1693 = vmatpush1.bf16.msra.mxu0 0
    %1694 = vmatprep.subr.bf16.mxu0 0
    %1695 = vmatpush1.bf16.msra.mxu0 0
    %1696 = vmatprep.subr.bf16.mxu0 0
    %1697 = vmatpush1.bf16.msra.mxu0 0
    %1698 = vmatprep.subr.bf16.mxu0 0
    %1699 = vmatpush1.bf16.msra.mxu0 0
    %1700 = vmatprep.subr.bf16.mxu0 0
    %1701 = vmatpush1.bf16.msra.mxu0 0
    %1702 = vmatprep.mubr.bf16.mxu0 0
    %1703 = vmatmul.mubr.bf16.gmra.mrb[0].mxu0 %v1669
    %v1704 = vpop.f32.mrb[0].mxu0
    %v1705 = vadd.f32 %v201, %v1704
    %v1706 = vpop.f32.mrb[0].mxu0
    %v1707 = vpop.f32.mrb[0].mxu0
    %v1708 = vadd.f32 %v201, %v1707
    %v1709 = vpop.f32.mrb[0].mxu0
    %1710 = vdwg.mxu0
    %v1711 = vmul.f32 %v1705, 2.0
    %v1712 = vmul.f32 %v1708, 2.0
    %v1713 = vsub.f32 %v1711, %v1618
    %v1714 = vsub.f32 %v1712, %v1619
    %v1715 = vmul.f32 %v1713, 0.03125
    %v1716 = vmul.f32 %v1714, 0.03125
    %v1717 = vadd.f32 %v1624, %v1715
    %v1718 = vadd.f32 %v1625, %v1716
    %v1719 = vadd.f32 %v1717, %v1715
    %v1720 = vadd.f32 %v1718, %v1716
    %v1721 = vpack.c.bf16 %v1720, %v1719
    %1722 = vmatprep.subr.bf16.mxu0 0
    %1723 = vmatpush1.bf16.msra.mxu0 %v138
    %1724 = vmatprep.subr.bf16.mxu0 0
    %1725 = vmatpush1.bf16.msra.mxu0 %v139
    %1726 = vmatprep.subr.bf16.mxu0 0
    %1727 = vmatpush1.bf16.msra.mxu0 %v140
    %1728 = vmatprep.subr.bf16.mxu0 0
    %1729 = vmatpush1.bf16.msra.mxu0 %v141
    %1730 = vmatprep.subr.bf16.mxu0 0
    %1731 = vmatpush1.bf16.msra.mxu0 %v142
    %1732 = vmatprep.subr.bf16.mxu0 0
    %1733 = vmatpush1.bf16.msra.mxu0 %v143
    %1734 = vmatprep.subr.bf16.mxu0 0
    %1735 = vmatpush1.bf16.msra.mxu0 %v144
    %1736 = vmatprep.subr.bf16.mxu0 0
    %1737 = vmatpush1.bf16.msra.mxu0 %v145
    %1738 = vmatprep.subr.bf16.mxu0 0
    %1739 = vmatpush1.bf16.msra.mxu0 0
    %1740 = vmatprep.subr.bf16.mxu0 0
    %1741 = vmatpush1.bf16.msra.mxu0 0
    %1742 = vmatprep.subr.bf16.mxu0 0
    %1743 = vmatpush1.bf16.msra.mxu0 0
    %1744 = vmatprep.subr.bf16.mxu0 0
    %1745 = vmatpush1.bf16.msra.mxu0 0
    %1746 = vmatprep.subr.bf16.mxu0 0
    %1747 = vmatpush1.bf16.msra.mxu0 0
    %1748 = vmatprep.subr.bf16.mxu0 0
    %1749 = vmatpush1.bf16.msra.mxu0 0
    %1750 = vmatprep.subr.bf16.mxu0 0
    %1751 = vmatpush1.bf16.msra.mxu0 0
    %1752 = vmatprep.subr.bf16.mxu0 0
    %1753 = vmatpush1.bf16.msra.mxu0 0
    %1754 = vmatprep.mubr.bf16.mxu0 0
    %1755 = vmatmul.mubr.bf16.gmra.mrb[0].mxu0 %v1721
    %v1756 = vpop.f32.mrb[0].mxu0
    %v1757 = vadd.f32 %v104, %v1756
    %v1758 = vpop.f32.mrb[0].mxu0
    %v1759 = vpop.f32.mrb[0].mxu0
    %v1760 = vadd.f32 %v104, %v1759
    %v1761 = vpop.f32.mrb[0].mxu0
    %1762 = vdwg.mxu0
    %v1763 = vpack.c.bf16 %v1760, %v1757
    %v1764 = vtanh.bf16.pop %v1763
    %1765 = vmatprep.subr.bf16.mxu0 0
    %1766 = vmatpush1.bf16.msra.mxu0 %v235
    %1767 = vmatprep.subr.bf16.mxu0 0
    %1768 = vmatpush1.bf16.msra.mxu0 %v236
    %1769 = vmatprep.subr.bf16.mxu0 0
    %1770 = vmatpush1.bf16.msra.mxu0 %v237
    %1771 = vmatprep.subr.bf16.mxu0 0
    %1772 = vmatpush1.bf16.msra.mxu0 %v238
    %1773 = vmatprep.subr.bf16.mxu0 0
    %1774 = vmatpush1.bf16.msra.mxu0 %v239
    %1775 = vmatprep.subr.bf16.mxu0 0
    %1776 = vmatpush1.bf16.msra.mxu0 %v240
    %1777 = vmatprep.subr.bf16.mxu0 0
    %1778 = vmatpush1.bf16.msra.mxu0 %v241
    %1779 = vmatprep.subr.bf16.mxu0 0
    %1780 = vmatpush1.bf16.msra.mxu0 %v242
    %1781 = vmatprep.subr.bf16.mxu0 0
    %1782 = vmatpush1.bf16.msra.mxu0 0
    %1783 = vmatprep.subr.bf16.mxu0 0
    %1784 = vmatpush1.bf16.msra.mxu0 0
    %1785 = vmatprep.subr.bf16.mxu0 0
    %1786 = vmatpush1.bf16.msra.mxu0 0
    %1787 = vmatprep.subr.bf16.mxu0 0
    %1788 = vmatpush1.bf16.msra.mxu0 0
    %1789 = vmatprep.subr.bf16.mxu0 0
    %1790 = vmatpush1.bf16.msra.mxu0 0
    %1791 = vmatprep.subr.bf16.mxu0 0
    %1792 = vmatpush1.bf16.msra.mxu0 0
    %1793 = vmatprep.subr.bf16.mxu0 0
    %1794 = vmatpush1.bf16.msra.mxu0 0
    %1795 = vmatprep.subr.bf16.mxu0 0
    %1796 = vmatpush1.bf16.msra.mxu0 0
    %1797 = vmatprep.mubr.bf16.mxu0 0
    %1798 = vmatmul.mubr.bf16.gmra.mrb[0].mxu0 %v1764
    %v1799 = vpop.f32.mrb[0].mxu0
    %v1800 = vadd.f32 %v201, %v1799
    %v1801 = vpop.f32.mrb[0].mxu0
    %v1802 = vpop.f32.mrb[0].mxu0
    %v1803 = vadd.f32 %v201, %v1802
    %v1804 = vpop.f32.mrb[0].mxu0
    %1805 = vdwg.mxu0
    %v1806 = vmul.f32 %v1800, 2.0
    %v1807 = vmul.f32 %v1803, 2.0
    %v1808 = vsub.f32 %v1806, %v1713
    %v1809 = vsub.f32 %v1807, %v1714
    %v1810 = vmul.f32 %v1808, 0.03125
    %v1811 = vmul.f32 %v1809, 0.03125
    %v1812 = vadd.f32 %v1719, %v1810
    %v1813 = vadd.f32 %v1720, %v1811
    %1814 = vst [vmem:[#allocation8] sm:$0xff] %v1812
    %1815 = vst [vmem:[#allocation8 + $0x8] sm:$0xff] %v1813
    // Predicated region
    $region34: #{tpu_custom_call.1} parent=1 // pred_check
      _
    $region35: #{tpu_custom_call.1} parent=1 // pred_check_branch
      %1817 = sbr.rel (0) target = $region37
    $region36: #{tpu_custom_call.1} parent=1 // pred_region
      %s1819 = ssub.s32 256, 256
      %1820 = vsyncadd [#allocation4], %s1819
      %s1821 = sshll.u32 [#allocation8], 4
      %s1822 = int_to_ptr.vmem [resolvable:$true] %s1821
      %1827 = dma.vmem_to_hbm [thread:$0]  %s1822, 256, %s5, [#allocation4], 128, 128, 8
    $region37: #{tpu_custom_call.1} parent=1 // pred_fallthru
      _
    // Predicated region
    $region38: #{tpu_custom_call.1} parent=1 // pred_check
      _
    $region39: #{tpu_custom_call.1} parent=1 // pred_check_branch
      %1829 = sbr.rel (0) target = $region41
    $region40: #{tpu_custom_call.1} parent=1 // pred_region
      %1830 = dma.done [#allocation4], 256
    $region41: #{tpu_custom_call.1} parent=1 // pred_fallthru
      _
    %1831 = vsyncpa [#allocation3], 1
    %1832 = vsyncpa [#allocation6], 1
    %1833 = vsyncpa [#allocation4], 1

</llo_original>
